<compile_context>
chip_gen: v7x
topology: tpu7x:2x2x1
jax: 0.10.0
libtpu: 0.0.40
codegen_flags: <defaults>
</compile_context>

<pallas_src>
import functools

import jax
import jax.numpy as jnp
from jax.experimental import pallas as pl
from jax.experimental.pallas import tpu as pltpu  # noqa: F401  (TPU backend)


# ----------------------------------------------------------------------------
# Fused forward kernel: whole network, whole batch, one invocation.
# ----------------------------------------------------------------------------
def fused_forward_kernel(B, L0,
                         x_ref,
                         w1_ref, b1_ref, w2_ref, b2_ref,
                         w3_ref, b3_ref, w4_ref, b4_ref,
                         wl1_ref, bl1_ref, wl2_ref, bl2_ref,
                         o_ref):
    # x_ref : (B, L0, 2)   channels-last input, f32
    # w1_ref: (3, 2, 32) f32 (VPU layer); b1_ref: (1, 32) f32
    # w2..w4: (3*Cin, Cout) bf16 im2col conv weights; b2..b4: (1, Cout) f32
    # wl1   : (256, 512) bf16, bl1: (1, 512) f32
    # wl2   : (512, OUT) bf16, bl2: (1, OUT) f32
    # o_ref : (B, OUT) f32
    f32 = jnp.float32
    bf16 = jnp.bfloat16

    # ---- Block 1: Conv1d(2->32, k=3, pad=1) on the VPU (K=2 is far too thin
    # for the MXU) + bias + ReLU + MaxPool1d(2).  One padded buffer, no
    # per-sample loops. ------------------------------------------------------
    cin0 = x_ref.shape[2]                               # 2
    c1 = w1_ref.shape[2]                                # 32
    x = x_ref[...]                                      # (B, L0, 2)
    zr = jnp.zeros((B, 1, cin0), f32)
    xp = jnp.concatenate([zr, x, zr], axis=1)           # padding=1 in VMEM
    w1 = w1_ref[...]                                    # (3, 2, 32)
    acc = jnp.zeros((B, L0, c1), f32)
    for k in range(3):
        for ci in range(cin0):
            acc = acc + xp[:, k:k + L0, ci:ci + 1] * w1[k, ci:ci + 1, :]
    a = jnp.maximum(acc + b1_ref[...], 0.0)             # bias + ReLU
    L = L0 // 2
    a = jnp.max(a.reshape(B, L, 2, c1), axis=2)         # MaxPool1d(2)

    # ---- Blocks 2-4: single im2col MXU dot per layer, bf16 operands,
    # f32 accumulate, then bias + ReLU + MaxPool1d(2). ------------------------
    for w_ref, b_ref in ((w2_ref, b2_ref), (w3_ref, b3_ref), (w4_ref, b4_ref)):
        cin = a.shape[2]
        cout = w_ref.shape[1]
        zr = jnp.zeros((B, 1, cin), f32)
        xp = jnp.concatenate([zr, a, zr], axis=1)       # (B, L+2, Cin), pad=1
        x3 = jnp.concatenate(                           # im2col: (B, L, 3*Cin)
            [xp[:, 0:L, :], xp[:, 1:L + 1, :], xp[:, 2:L + 2, :]], axis=2)
        lhs = x3.reshape(B * L, 3 * cin).astype(bf16)   # batch folded into M
        y = jnp.dot(lhs, w_ref[...], preferred_element_type=f32)  # (B*L, Cout)
        y = jnp.maximum(y + b_ref[...], 0.0)            # bias + ReLU (f32)
        L = L // 2
        a = jnp.max(y.reshape(B, L, 2, cout), axis=2)   # MaxPool1d(2)

    # ---- AdaptiveAvgPool1d(1) + Flatten -> (B, 256). -------------------------
    C = a.shape[2]
    if L == 1:
        feat = a.reshape(B, C)
    else:
        feat = jnp.mean(a, axis=1)

    # ---- Classifier: Linear + ReLU + [Dropout = identity] + Linear + Softplus.
    h = jnp.dot(feat.astype(bf16), wl1_ref[...],
                preferred_element_type=f32) + bl1_ref[...]
    h = jnp.maximum(h, 0.0)
    y = jnp.dot(h.astype(bf16), wl2_ref[...],
                preferred_element_type=f32) + bl2_ref[...]
    # numerically stable Softplus: max(y, 0) + log1p(exp(-|y|))
    o_ref[...] = jnp.maximum(y, 0.0) + jnp.log1p(jnp.exp(-jnp.abs(y)))


def _full_block(shape):
    zeros = (0,) * len(shape)
    return pl.BlockSpec(shape, lambda *_: zeros)


# ----------------------------------------------------------------------------
# Wrapper: one pallas_call, everything resident in VMEM, no grid.
# ----------------------------------------------------------------------------
def enhanced_cnn_forward(params, target_waveform, egf):
    """target_waveform, egf: (B, L) f32  ->  (B, output_length) f32."""
    convs, (wl1, bl1, wl2, bl2) = params
    B, L = target_waveform.shape
    # Four MaxPool1d(2) stages: require even lengths at every stage.
    assert L % 16 == 0, "L must be divisible by 16 (4x MaxPool1d(2))"
    out_len = wl2.shape[1]

    # torch.stack([tw, egf], dim=1) is (B, 2, L); the kernel uses channels-last
    # (B, L, 2) so the lane dim carries channels.
    x = jnp.stack([target_waveform, egf], axis=-1).astype(jnp.float32)

    # Layer-1 conv weight stays f32 (VPU path); layers 2-4 are pre-reshaped to
    # (3*Cin, Cout) im2col layout and cast to bf16 (halves the dominant weight
    # DMA; MXU native bf16 input, f32 accumulate in-kernel).
    (w1, b1) = convs[0]
    flat = [w1.astype(jnp.float32), b1.reshape(1, -1).astype(jnp.float32)]
    for (w, b) in convs[1:]:
        k, cin, cout = w.shape
        flat.append(w.reshape(k * cin, cout).astype(jnp.bfloat16))
        flat.append(b.reshape(1, -1).astype(jnp.float32))
    operands = (x, *flat,
                wl1.astype(jnp.bfloat16), bl1.reshape(1, -1).astype(jnp.float32),
                wl2.astype(jnp.bfloat16), bl2.reshape(1, -1).astype(jnp.float32))

    # VMEM guard for the all-resident (no-grid) design; v7x has only 64 MiB.
    operand_bytes = sum(int(a.size) * a.dtype.itemsize for a in operands)
    vmem_estimate = 2 * operand_bytes + 8 * B * L * 256 * 4
    assert vmem_estimate < 32 * 1024 * 1024, \
        "activations/weights too large for all-resident VMEM; add a grid"

    # Advisory cost estimate so XLA overlaps this ~µs custom call with
    # surrounding HLO instead of serializing it.
    conv_flops = 0
    Li = L
    for (w, _) in convs:
        k, cin, cout = w.shape
        conv_flops += 2 * B * Li * k * cin * cout
        Li //= 2
    lin_flops = 2 * B * (wl1.shape[0] * wl1.shape[1] + wl2.shape[0] * wl2.shape[1])
    cost = pl.CostEstimate(
        flops=int(conv_flops + lin_flops),
        transcendentals=int(2 * B * out_len),
        bytes_accessed=int(operand_bytes + B * out_len * 4))

    kernel = functools.partial(fused_forward_kernel, B, L)
    return pl.pallas_call(
        kernel,
        out_shape=jax.ShapeDtypeStruct((B, out_len), jnp.float32),
        in_specs=[_full_block(a.shape) for a in operands],
        out_specs=_full_block((B, out_len)),
        cost_estimate=cost,
    )(*operands)


# ----------------------------------------------------------------------------
# Parameter init (deterministic, synthetic)
# ----------------------------------------------------------------------------
def init_params(key, in_channels=2, output_length=128):
    chans = [in_channels, 32, 64, 128, 256]
    keys = jax.random.split(key, 12)
    convs = []
    for i in range(4):
        cin, cout = chans[i], chans[i + 1]
        scale = 1.0 / jnp.sqrt(3.0 * cin)
        w = jax.random.normal(keys[2 * i], (3, cin, cout), jnp.float32) * scale
        b = jax.random.normal(keys[2 * i + 1], (cout,), jnp.float32) * 0.01
        convs.append((w, b))
    w1 = jax.random.normal(keys[8], (256, 512), jnp.float32) / jnp.sqrt(256.0)
    b1 = jax.random.normal(keys[9], (512,), jnp.float32) * 0.01
    w2 = jax.random.normal(keys[10], (512, output_length), jnp.float32) / jnp.sqrt(512.0)
    b2 = jax.random.normal(keys[11], (output_length,), jnp.float32) * 0.01
    return convs, (w1, b1, w2, b2)


# ----------------------------------------------------------------------------
# Pure-JAX f32 reference (independent math path) for a correctness check.
# ----------------------------------------------------------------------------
def reference_forward(params, target_waveform, egf):
    convs, (wl1, bl1, wl2, bl2) = params
    hi = jax.lax.Precision.HIGHEST
    x = jnp.stack([target_waveform, egf], axis=1).astype(jnp.float32)  # (B,2,L)
    for (w, b) in convs:
        wt = jnp.transpose(w, (2, 1, 0))            # (Cout, Cin, 3) torch layout
        x = jax.lax.conv_general_dilated(
            x, wt, window_strides=(1,), padding=((1, 1),),
            dimension_numbers=("NCH", "OIH", "NCH"), precision=hi)
        x = jnp.maximum(x + b[None, :, None], 0.0)
        Bc, Cc, Lc = x.shape
        x = jnp.max(x.reshape(Bc, Cc, Lc // 2, 2), axis=-1)   # MaxPool1d(2)
    feat = jnp.mean(x, axis=-1)                     # AdaptiveAvgPool1d(1)+Flatten
    h = jnp.maximum(jnp.dot(feat, wl1, precision=hi) + bl1, 0.0)
    y = jnp.dot(h, wl2, precision=hi) + bl2
    return jnp.maximum(y, 0.0) + jnp.log1p(jnp.exp(-jnp.abs(y)))


if __name__ == "__main__":
    B, L, OUT = 2, 16, 128
    key = jax.random.PRNGKey(0)
    kp, kt, ke = jax.random.split(key, 3)
    params = init_params(kp, in_channels=2, output_length=OUT)
    target_waveform = jax.random.normal(kt, (B, L), jnp.float32)
    egf = jax.random.normal(ke, (B, L), jnp.float32)

    fwd = jax.jit(enhanced_cnn_forward)
    out = jax.block_until_ready(fwd(params, target_waveform, egf))
    assert out.shape == (B, OUT) and out.dtype == jnp.float32
    assert bool(jnp.all(out >= 0.0))              # Softplus output is non-negative

    ref = jax.block_until_ready(reference_forward(params, target_waveform, egf))
    # Tolerance accounts for the bf16 MXU operand path (f32 accumulate);
    # the reference runs the full chain in f32.
    assert bool(jnp.allclose(out, ref, rtol=1e-1, atol=1e-1)), \
        float(jnp.max(jnp.abs(out - ref)))

    print("KERNEL_OK")
</pallas_src>

<mosaic_0001>
module attributes {stable_mosaic.version = 11 : i64} {
  func.func @fused_forward_kernel(%arg0: memref<2x16x2xf32, #tpu.memory_space<vmem>>, %arg1: memref<3x2x32xf32, #tpu.memory_space<vmem>>, %arg2: memref<1x32xf32, #tpu.memory_space<vmem>>, %arg3: memref<96x64xbf16, #tpu.memory_space<vmem>>, %arg4: memref<1x64xf32, #tpu.memory_space<vmem>>, %arg5: memref<192x128xbf16, #tpu.memory_space<vmem>>, %arg6: memref<1x128xf32, #tpu.memory_space<vmem>>, %arg7: memref<384x256xbf16, #tpu.memory_space<vmem>>, %arg8: memref<1x256xf32, #tpu.memory_space<vmem>>, %arg9: memref<256x512xbf16, #tpu.memory_space<vmem>>, %arg10: memref<1x512xf32, #tpu.memory_space<vmem>>, %arg11: memref<512x128xbf16, #tpu.memory_space<vmem>>, %arg12: memref<1x128xf32, #tpu.memory_space<vmem>>, %arg13: memref<2x128xf32, #tpu.memory_space<vmem>>) attributes {dimension_semantics = [], scalar_prefetch = 0 : i64, scratch_operands = 0 : i64, tpu.core_type = #tpu.core_type<tc>} {
    %c0 = arith.constant 0 : index
    %c0_0 = arith.constant 0 : index
    %c0_1 = arith.constant 0 : index
    %0 = vector.load %arg0[%c0, %c0_0, %c0_1] : memref<2x16x2xf32, #tpu.memory_space<vmem>>, vector<2x16x2xf32>
    %cst = arith.constant 0.000000e+00 : f32
    %1 = vector.broadcast %cst : f32 to vector<2x1x2xf32>
    %2 = tpu.concatenate %1, %0, %1 in 1 : vector<2x1x2xf32>, vector<2x16x2xf32>, vector<2x1x2xf32> -> vector<2x18x2xf32>
    %c0_2 = arith.constant 0 : index
    %c0_3 = arith.constant 0 : index
    %c0_4 = arith.constant 0 : index
    %3 = vector.load %arg1[%c0_2, %c0_3, %c0_4] : memref<3x2x32xf32, #tpu.memory_space<vmem>>, vector<3x2x32xf32>
    %cst_5 = arith.constant 0.000000e+00 : f32
    %4 = vector.broadcast %cst_5 : f32 to vector<2x16x32xf32>
    %5 = vector.extract_strided_slice %2 {offsets = [0, 0, 0], sizes = [2, 16, 1], strides = [1, 1, 1]} : vector<2x18x2xf32> to vector<2x16x1xf32>
    %6 = vector.extract_strided_slice %3 {offsets = [0, 0, 0], sizes = [1, 1, 32], strides = [1, 1, 1]} : vector<3x2x32xf32> to vector<1x1x32xf32>
    %7 = vector.shape_cast %6 : vector<1x1x32xf32> to vector<1x32xf32>
    %8 = vector.shape_cast %7 : vector<1x32xf32> to vector<1x1x32xf32>
    %9 = vector.broadcast %5 : vector<2x16x1xf32> to vector<2x16x32xf32>
    %10 = vector.broadcast %8 : vector<1x1x32xf32> to vector<2x16x32xf32>
    %11 = arith.mulf %9, %10 : vector<2x16x32xf32>
    %12 = arith.addf %4, %11 : vector<2x16x32xf32>
    %13 = vector.extract_strided_slice %2 {offsets = [0, 0, 1], sizes = [2, 16, 1], strides = [1, 1, 1]} : vector<2x18x2xf32> to vector<2x16x1xf32>
    %14 = vector.extract_strided_slice %3 {offsets = [0, 1, 0], sizes = [1, 1, 32], strides = [1, 1, 1]} : vector<3x2x32xf32> to vector<1x1x32xf32>
    %15 = vector.shape_cast %14 : vector<1x1x32xf32> to vector<1x32xf32>
    %16 = vector.shape_cast %15 : vector<1x32xf32> to vector<1x1x32xf32>
    %17 = vector.broadcast %13 : vector<2x16x1xf32> to vector<2x16x32xf32>
    %18 = vector.broadcast %16 : vector<1x1x32xf32> to vector<2x16x32xf32>
    %19 = arith.mulf %17, %18 : vector<2x16x32xf32>
    %20 = arith.addf %12, %19 : vector<2x16x32xf32>
    %21 = vector.extract_strided_slice %2 {offsets = [0, 1, 0], sizes = [2, 16, 1], strides = [1, 1, 1]} : vector<2x18x2xf32> to vector<2x16x1xf32>
    %22 = vector.extract_strided_slice %3 {offsets = [1, 0, 0], sizes = [1, 1, 32], strides = [1, 1, 1]} : vector<3x2x32xf32> to vector<1x1x32xf32>
    %23 = vector.shape_cast %22 : vector<1x1x32xf32> to vector<1x32xf32>
    %24 = vector.shape_cast %23 : vector<1x32xf32> to vector<1x1x32xf32>
    %25 = vector.broadcast %21 : vector<2x16x1xf32> to vector<2x16x32xf32>
    %26 = vector.broadcast %24 : vector<1x1x32xf32> to vector<2x16x32xf32>
    %27 = arith.mulf %25, %26 : vector<2x16x32xf32>
    %28 = arith.addf %20, %27 : vector<2x16x32xf32>
    %29 = vector.extract_strided_slice %2 {offsets = [0, 1, 1], sizes = [2, 16, 1], strides = [1, 1, 1]} : vector<2x18x2xf32> to vector<2x16x1xf32>
    %30 = vector.extract_strided_slice %3 {offsets = [1, 1, 0], sizes = [1, 1, 32], strides = [1, 1, 1]} : vector<3x2x32xf32> to vector<1x1x32xf32>
    %31 = vector.shape_cast %30 : vector<1x1x32xf32> to vector<1x32xf32>
    %32 = vector.shape_cast %31 : vector<1x32xf32> to vector<1x1x32xf32>
    %33 = vector.broadcast %29 : vector<2x16x1xf32> to vector<2x16x32xf32>
    %34 = vector.broadcast %32 : vector<1x1x32xf32> to vector<2x16x32xf32>
    %35 = arith.mulf %33, %34 : vector<2x16x32xf32>
    %36 = arith.addf %28, %35 : vector<2x16x32xf32>
    %37 = vector.extract_strided_slice %2 {offsets = [0, 2, 0], sizes = [2, 16, 1], strides = [1, 1, 1]} : vector<2x18x2xf32> to vector<2x16x1xf32>
    %38 = vector.extract_strided_slice %3 {offsets = [2, 0, 0], sizes = [1, 1, 32], strides = [1, 1, 1]} : vector<3x2x32xf32> to vector<1x1x32xf32>
    %39 = vector.shape_cast %38 : vector<1x1x32xf32> to vector<1x32xf32>
    %40 = vector.shape_cast %39 : vector<1x32xf32> to vector<1x1x32xf32>
    %41 = vector.broadcast %37 : vector<2x16x1xf32> to vector<2x16x32xf32>
    %42 = vector.broadcast %40 : vector<1x1x32xf32> to vector<2x16x32xf32>
    %43 = arith.mulf %41, %42 : vector<2x16x32xf32>
    %44 = arith.addf %36, %43 : vector<2x16x32xf32>
    %45 = vector.extract_strided_slice %2 {offsets = [0, 2, 1], sizes = [2, 16, 1], strides = [1, 1, 1]} : vector<2x18x2xf32> to vector<2x16x1xf32>
    %46 = vector.extract_strided_slice %3 {offsets = [2, 1, 0], sizes = [1, 1, 32], strides = [1, 1, 1]} : vector<3x2x32xf32> to vector<1x1x32xf32>
    %47 = vector.shape_cast %46 : vector<1x1x32xf32> to vector<1x32xf32>
    %48 = vector.shape_cast %47 : vector<1x32xf32> to vector<1x1x32xf32>
    %49 = vector.broadcast %45 : vector<2x16x1xf32> to vector<2x16x32xf32>
    %50 = vector.broadcast %48 : vector<1x1x32xf32> to vector<2x16x32xf32>
    %51 = arith.mulf %49, %50 : vector<2x16x32xf32>
    %52 = arith.addf %44, %51 : vector<2x16x32xf32>
    %c0_6 = arith.constant 0 : index
    %c0_7 = arith.constant 0 : index
    %53 = vector.load %arg2[%c0_6, %c0_7] : memref<1x32xf32, #tpu.memory_space<vmem>>, vector<1x32xf32>
    %54 = vector.shape_cast %53 : vector<1x32xf32> to vector<1x1x32xf32>
    %55 = vector.broadcast %54 : vector<1x1x32xf32> to vector<2x16x32xf32>
    %56 = arith.addf %52, %55 : vector<2x16x32xf32>
    %cst_8 = arith.constant 0.000000e+00 : f32
    %57 = vector.broadcast %cst_8 : f32 to vector<2x16x32xf32>
    %58 = arith.maximumf %56, %57 : vector<2x16x32xf32>
    %59 = vector.shape_cast %58 : vector<2x16x32xf32> to vector<2x8x2x32xf32>
    %cst_9 = arith.constant dense<0xFF800000> : vector<2x8x32xf32>
    %60 = vector.multi_reduction <maximumf>, %59, %cst_9 [2] : vector<2x8x2x32xf32> to vector<2x8x32xf32>
    %cst_10 = arith.constant 0.000000e+00 : f32
    %61 = vector.broadcast %cst_10 : f32 to vector<2x1x32xf32>
    %62 = tpu.concatenate %61, %60, %61 in 1 : vector<2x1x32xf32>, vector<2x8x32xf32>, vector<2x1x32xf32> -> vector<2x10x32xf32>
    %63 = vector.extract_strided_slice %62 {offsets = [0, 0, 0], sizes = [2, 8, 32], strides = [1, 1, 1]} : vector<2x10x32xf32> to vector<2x8x32xf32>
    %64 = vector.extract_strided_slice %62 {offsets = [0, 1, 0], sizes = [2, 8, 32], strides = [1, 1, 1]} : vector<2x10x32xf32> to vector<2x8x32xf32>
    %65 = vector.extract_strided_slice %62 {offsets = [0, 2, 0], sizes = [2, 8, 32], strides = [1, 1, 1]} : vector<2x10x32xf32> to vector<2x8x32xf32>
    %66 = tpu.concatenate %63, %64, %65 in 2 : vector<2x8x32xf32>, vector<2x8x32xf32>, vector<2x8x32xf32> -> vector<2x8x96xf32>
    %67 = vector.shape_cast %66 : vector<2x8x96xf32> to vector<16x96xf32>
    %68 = arith.truncf %67 : vector<16x96xf32> to vector<16x96xbf16>
    %c0_11 = arith.constant 0 : index
    %c0_12 = arith.constant 0 : index
    %69 = vector.load %arg3[%c0_11, %c0_12] : memref<96x64xbf16, #tpu.memory_space<vmem>>, vector<96x64xbf16>
    %cst_13 = arith.constant dense<0.000000e+00> : vector<16x64xf32>
    %70 = tpu.matmul %68, %69, %cst_13 {dimension_numbers = #tpu.dot_dimension_numbers<[1], [0], [0], [1], [0, 0, 1, 1], [], []>} : vector<16x96xbf16>, vector<96x64xbf16>, vector<16x64xf32> -> vector<16x64xf32>
    %c0_14 = arith.constant 0 : index
    %c0_15 = arith.constant 0 : index
    %71 = vector.load %arg4[%c0_14, %c0_15] : memref<1x64xf32, #tpu.memory_space<vmem>>, vector<1x64xf32>
    %72 = vector.broadcast %71 : vector<1x64xf32> to vector<16x64xf32>
    %73 = arith.addf %70, %72 : vector<16x64xf32>
    %cst_16 = arith.constant 0.000000e+00 : f32
    %74 = vector.broadcast %cst_16 : f32 to vector<16x64xf32>
    %75 = arith.maximumf %73, %74 : vector<16x64xf32>
    %76 = vector.shape_cast %75 : vector<16x64xf32> to vector<2x4x2x64xf32>
    %cst_17 = arith.constant dense<0xFF800000> : vector<2x4x64xf32>
    %77 = vector.multi_reduction <maximumf>, %76, %cst_17 [2] : vector<2x4x2x64xf32> to vector<2x4x64xf32>
    %cst_18 = arith.constant 0.000000e+00 : f32
    %78 = vector.broadcast %cst_18 : f32 to vector<2x1x64xf32>
    %79 = tpu.concatenate %78, %77, %78 in 1 : vector<2x1x64xf32>, vector<2x4x64xf32>, vector<2x1x64xf32> -> vector<2x6x64xf32>
    %80 = vector.extract_strided_slice %79 {offsets = [0, 0, 0], sizes = [2, 4, 64], strides = [1, 1, 1]} : vector<2x6x64xf32> to vector<2x4x64xf32>
    %81 = vector.extract_strided_slice %79 {offsets = [0, 1, 0], sizes = [2, 4, 64], strides = [1, 1, 1]} : vector<2x6x64xf32> to vector<2x4x64xf32>
    %82 = vector.extract_strided_slice %79 {offsets = [0, 2, 0], sizes = [2, 4, 64], strides = [1, 1, 1]} : vector<2x6x64xf32> to vector<2x4x64xf32>
    %83 = tpu.concatenate %80, %81, %82 in 2 : vector<2x4x64xf32>, vector<2x4x64xf32>, vector<2x4x64xf32> -> vector<2x4x192xf32>
    %84 = vector.shape_cast %83 : vector<2x4x192xf32> to vector<8x192xf32>
    %85 = arith.truncf %84 : vector<8x192xf32> to vector<8x192xbf16>
    %c0_19 = arith.constant 0 : index
    %c0_20 = arith.constant 0 : index
    %86 = vector.load %arg5[%c0_19, %c0_20] : memref<192x128xbf16, #tpu.memory_space<vmem>>, vector<192x128xbf16>
    %cst_21 = arith.constant dense<0.000000e+00> : vector<8x128xf32>
    %87 = tpu.matmul %85, %86, %cst_21 {dimension_numbers = #tpu.dot_dimension_numbers<[1], [0], [0], [1], [0, 0, 1, 1], [], []>} : vector<8x192xbf16>, vector<192x128xbf16>, vector<8x128xf32> -> vector<8x128xf32>
    %c0_22 = arith.constant 0 : index
    %c0_23 = arith.constant 0 : index
    %88 = vector.load %arg6[%c0_22, %c0_23] : memref<1x128xf32, #tpu.memory_space<vmem>>, vector<1x128xf32>
    %89 = vector.broadcast %88 : vector<1x128xf32> to vector<8x128xf32>
    %90 = arith.addf %87, %89 : vector<8x128xf32>
    %cst_24 = arith.constant 0.000000e+00 : f32
    %91 = vector.broadcast %cst_24 : f32 to vector<8x128xf32>
    %92 = arith.maximumf %90, %91 : vector<8x128xf32>
    %93 = vector.shape_cast %92 : vector<8x128xf32> to vector<2x2x2x128xf32>
    %cst_25 = arith.constant dense<0xFF800000> : vector<2x2x128xf32>
    %94 = vector.multi_reduction <maximumf>, %93, %cst_25 [2] : vector<2x2x2x128xf32> to vector<2x2x128xf32>
    %cst_26 = arith.constant 0.000000e+00 : f32
    %95 = vector.broadcast %cst_26 : f32 to vector<2x1x128xf32>
    %96 = tpu.concatenate %95, %94, %95 in 1 : vector<2x1x128xf32>, vector<2x2x128xf32>, vector<2x1x128xf32> -> vector<2x4x128xf32>
    %97 = vector.extract_strided_slice %96 {offsets = [0, 0, 0], sizes = [2, 2, 128], strides = [1, 1, 1]} : vector<2x4x128xf32> to vector<2x2x128xf32>
    %98 = vector.extract_strided_slice %96 {offsets = [0, 1, 0], sizes = [2, 2, 128], strides = [1, 1, 1]} : vector<2x4x128xf32> to vector<2x2x128xf32>
    %99 = vector.extract_strided_slice %96 {offsets = [0, 2, 0], sizes = [2, 2, 128], strides = [1, 1, 1]} : vector<2x4x128xf32> to vector<2x2x128xf32>
    %100 = tpu.concatenate %97, %98, %99 in 2 : vector<2x2x128xf32>, vector<2x2x128xf32>, vector<2x2x128xf32> -> vector<2x2x384xf32>
    %101 = vector.shape_cast %100 : vector<2x2x384xf32> to vector<4x384xf32>
    %102 = arith.truncf %101 : vector<4x384xf32> to vector<4x384xbf16>
    %c0_27 = arith.constant 0 : index
    %c0_28 = arith.constant 0 : index
    %103 = vector.load %arg7[%c0_27, %c0_28] : memref<384x256xbf16, #tpu.memory_space<vmem>>, vector<384x256xbf16>
    %cst_29 = arith.constant dense<0.000000e+00> : vector<4x256xf32>
    %104 = tpu.matmul %102, %103, %cst_29 {dimension_numbers = #tpu.dot_dimension_numbers<[1], [0], [0], [1], [0, 0, 1, 1], [], []>} : vector<4x384xbf16>, vector<384x256xbf16>, vector<4x256xf32> -> vector<4x256xf32>
    %c0_30 = arith.constant 0 : index
    %c0_31 = arith.constant 0 : index
    %105 = vector.load %arg8[%c0_30, %c0_31] : memref<1x256xf32, #tpu.memory_space<vmem>>, vector<1x256xf32>
    %106 = vector.broadcast %105 : vector<1x256xf32> to vector<4x256xf32>
    %107 = arith.addf %104, %106 : vector<4x256xf32>
    %cst_32 = arith.constant 0.000000e+00 : f32
    %108 = vector.broadcast %cst_32 : f32 to vector<4x256xf32>
    %109 = arith.maximumf %107, %108 : vector<4x256xf32>
    %110 = vector.shape_cast %109 : vector<4x256xf32> to vector<2x1x2x256xf32>
    %cst_33 = arith.constant dense<0xFF800000> : vector<2x1x256xf32>
    %111 = vector.multi_reduction <maximumf>, %110, %cst_33 [2] : vector<2x1x2x256xf32> to vector<2x1x256xf32>
    %112 = vector.shape_cast %111 : vector<2x1x256xf32> to vector<2x256xf32>
    %113 = arith.truncf %112 : vector<2x256xf32> to vector<2x256xbf16>
    %c0_34 = arith.constant 0 : index
    %c0_35 = arith.constant 0 : index
    %114 = vector.load %arg9[%c0_34, %c0_35] : memref<256x512xbf16, #tpu.memory_space<vmem>>, vector<256x512xbf16>
    %cst_36 = arith.constant dense<0.000000e+00> : vector<2x512xf32>
    %115 = tpu.matmul %113, %114, %cst_36 {dimension_numbers = #tpu.dot_dimension_numbers<[1], [0], [0], [1], [0, 0, 1, 1], [], []>} : vector<2x256xbf16>, vector<256x512xbf16>, vector<2x512xf32> -> vector<2x512xf32>
    %c0_37 = arith.constant 0 : index
    %c0_38 = arith.constant 0 : index
    %116 = vector.load %arg10[%c0_37, %c0_38] : memref<1x512xf32, #tpu.memory_space<vmem>>, vector<1x512xf32>
    %117 = vector.broadcast %116 : vector<1x512xf32> to vector<2x512xf32>
    %118 = arith.addf %115, %117 : vector<2x512xf32>
    %cst_39 = arith.constant 0.000000e+00 : f32
    %119 = vector.broadcast %cst_39 : f32 to vector<2x512xf32>
    %120 = arith.maximumf %118, %119 : vector<2x512xf32>
    %121 = arith.truncf %120 : vector<2x512xf32> to vector<2x512xbf16>
    %c0_40 = arith.constant 0 : index
    %c0_41 = arith.constant 0 : index
    %122 = vector.load %arg11[%c0_40, %c0_41] : memref<512x128xbf16, #tpu.memory_space<vmem>>, vector<512x128xbf16>
    %cst_42 = arith.constant dense<0.000000e+00> : vector<2x128xf32>
    %123 = tpu.matmul %121, %122, %cst_42 {dimension_numbers = #tpu.dot_dimension_numbers<[1], [0], [0], [1], [0, 0, 1, 1], [], []>} : vector<2x512xbf16>, vector<512x128xbf16>, vector<2x128xf32> -> vector<2x128xf32>
    %c0_43 = arith.constant 0 : index
    %c0_44 = arith.constant 0 : index
    %124 = vector.load %arg12[%c0_43, %c0_44] : memref<1x128xf32, #tpu.memory_space<vmem>>, vector<1x128xf32>
    %125 = vector.broadcast %124 : vector<1x128xf32> to vector<2x128xf32>
    %126 = arith.addf %123, %125 : vector<2x128xf32>
    %cst_45 = arith.constant 0.000000e+00 : f32
    %127 = vector.broadcast %cst_45 : f32 to vector<2x128xf32>
    %128 = arith.maximumf %126, %127 : vector<2x128xf32>
    %129 = math.absf %126 : vector<2x128xf32>
    %cst_46 = arith.constant 0.000000e+00 : f32
    %130 = vector.broadcast %cst_46 : f32 to vector<2x128xf32>
    %131 = arith.subf %130, %129 : vector<2x128xf32>
    %132 = math.exp %131 : vector<2x128xf32>
    %133 = math.log1p %132 : vector<2x128xf32>
    %134 = arith.addf %128, %133 : vector<2x128xf32>
    %c0_47 = arith.constant 0 : index
    %c0_48 = arith.constant 0 : index
    %135 = vector.load %arg13[%c0_47, %c0_48] : memref<2x128xf32, #tpu.memory_space<vmem>>, vector<2x128xf32>
    tpu.vector_store %arg13[%c0_47, %c0_48], %134 {strides = array<i32>} : memref<2x128xf32, #tpu.memory_space<vmem>>, vector<2x128xf32>,
    return
  }
}

</mosaic_0001>

<llo_original>
// kernel: enhanced_cnn_forward.1
$region0: #{enhanced_cnn_forward.1}
  #allocation0 [shape = 'u32[]', space=smem, size = 0x4, offset = 0x4, fixed_abs, tag = 'smem constant byte address 0x4 - core index']
  #allocation1 [shape = 'u32[144,128]{1,0:T(1,128)}', space=vmem, size = 0x12000, scoped, tag = 'internal scratch']
  %s0 = inlined_call_operand.vmem [shape: f32[2,16,2], index: 0, kind: input, shape index: {}]
  %s1 = inlined_call_operand.vmem [shape: f32[3,2,32], index: 1, kind: input, shape index: {}]
  %s2 = inlined_call_operand.vmem [shape: f32[1,32], index: 2, kind: input, shape index: {}]
  %s3 = inlined_call_operand.vmem [shape: bf16[96,64], index: 3, kind: input, shape index: {}]
  %s4 = inlined_call_operand.vmem [shape: f32[1,64], index: 4, kind: input, shape index: {}]
  %s5 = inlined_call_operand.vmem [shape: bf16[192,128], index: 5, kind: input, shape index: {}]
  %s6 = inlined_call_operand.vmem [shape: f32[1,128], index: 6, kind: input, shape index: {}]
  %s7 = inlined_call_operand.vmem [shape: bf16[384,256], index: 7, kind: input, shape index: {}]
  %s8 = inlined_call_operand.vmem [shape: f32[1,256], index: 8, kind: input, shape index: {}]
  %s9 = inlined_call_operand.vmem [shape: bf16[256,512], index: 9, kind: input, shape index: {}]
  %s10 = inlined_call_operand.vmem [shape: f32[1,512], index: 10, kind: input, shape index: {}]
  %s11 = inlined_call_operand.vmem [shape: bf16[512,128], index: 11, kind: input, shape index: {}]
  %s12 = inlined_call_operand.vmem [shape: f32[1,128], index: 12, kind: input, shape index: {}]
  %s13 = inlined_call_operand.hbm [shape: f32[2,128], index: 13, kind: output, shape index: {}]
  %s14 = sld [smem:[#allocation0]]
  $region62: #{enhanced_cnn_forward.1} parent=0
    _
  %s16 = ssub.s32 1, %s14
  %s17 = scalar_select 0, %s16, %s14
  $region1: #{enhanced_cnn_forward.1} parent=0
    #allocation2 [shape = 'u8[1024]{0}', space=vmem, size = 0x400, scoped, tag = 'output window, operand 0, single buffered']
    #allocation3 [shape = 's32[1]{0}', space=sflag, size = 0x4, scoped, tag = 'scoped memory for enhanced_cnn_forward.1']
    %18 = vsyncpa [#allocation3], 0
    // Predicated region
    $region2: #{enhanced_cnn_forward.1} parent=1 // pred_check
      _
    $region3: #{enhanced_cnn_forward.1} parent=1 // pred_check_branch
      %20 = sbr.rel (0) target = $region5
    $region4: #{enhanced_cnn_forward.1} parent=1 // pred_region
      _
    $region5: #{enhanced_cnn_forward.1} parent=1 // pred_fallthru
      _
    // Predicated region
    $region6: #{enhanced_cnn_forward.1} parent=1 // pred_check
      _
    $region7: #{enhanced_cnn_forward.1} parent=1 // pred_check_branch
      %22 = sbr.rel (0) target = $region9
    $region8: #{enhanced_cnn_forward.1} parent=1 // pred_region
      _
    $region9: #{enhanced_cnn_forward.1} parent=1 // pred_fallthru
      _
    // Predicated region
    $region10: #{enhanced_cnn_forward.1} parent=1 // pred_check
      _
    $region11: #{enhanced_cnn_forward.1} parent=1 // pred_check_branch
      %24 = sbr.rel (0) target = $region13
    $region12: #{enhanced_cnn_forward.1} parent=1 // pred_region
      _
    $region13: #{enhanced_cnn_forward.1} parent=1 // pred_fallthru
      _
    // Predicated region
    $region14: #{enhanced_cnn_forward.1} parent=1 // pred_check
      _
    $region15: #{enhanced_cnn_forward.1} parent=1 // pred_check_branch
      %26 = sbr.rel (0) target = $region17
    $region16: #{enhanced_cnn_forward.1} parent=1 // pred_region
      _
    $region17: #{enhanced_cnn_forward.1} parent=1 // pred_fallthru
      _
    // Predicated region
    $region18: #{enhanced_cnn_forward.1} parent=1 // pred_check
      _
    $region19: #{enhanced_cnn_forward.1} parent=1 // pred_check_branch
      %28 = sbr.rel (0) target = $region21
    $region20: #{enhanced_cnn_forward.1} parent=1 // pred_region
      _
    $region21: #{enhanced_cnn_forward.1} parent=1 // pred_fallthru
      _
    // Predicated region
    $region22: #{enhanced_cnn_forward.1} parent=1 // pred_check
      _
    $region23: #{enhanced_cnn_forward.1} parent=1 // pred_check_branch
      %30 = sbr.rel (0) target = $region25
    $region24: #{enhanced_cnn_forward.1} parent=1 // pred_region
      _
    $region25: #{enhanced_cnn_forward.1} parent=1 // pred_fallthru
      _
    // Predicated region
    $region26: #{enhanced_cnn_forward.1} parent=1 // pred_check
      _
    $region27: #{enhanced_cnn_forward.1} parent=1 // pred_check_branch
      %32 = sbr.rel (0) target = $region29
    $region28: #{enhanced_cnn_forward.1} parent=1 // pred_region
      _
    $region29: #{enhanced_cnn_forward.1} parent=1 // pred_fallthru
      _
    // Predicated region
    $region30: #{enhanced_cnn_forward.1} parent=1 // pred_check
      _
    $region31: #{enhanced_cnn_forward.1} parent=1 // pred_check_branch
      %34 = sbr.rel (0) target = $region33
    $region32: #{enhanced_cnn_forward.1} parent=1 // pred_region
      _
    $region33: #{enhanced_cnn_forward.1} parent=1 // pred_fallthru
      _
    // Predicated region
    $region34: #{enhanced_cnn_forward.1} parent=1 // pred_check
      _
    $region35: #{enhanced_cnn_forward.1} parent=1 // pred_check_branch
      %36 = sbr.rel (0) target = $region37
    $region36: #{enhanced_cnn_forward.1} parent=1 // pred_region
      _
    $region37: #{enhanced_cnn_forward.1} parent=1 // pred_fallthru
      _
    // Predicated region
    $region38: #{enhanced_cnn_forward.1} parent=1 // pred_check
      _
    $region39: #{enhanced_cnn_forward.1} parent=1 // pred_check_branch
      %38 = sbr.rel (0) target = $region41
    $region40: #{enhanced_cnn_forward.1} parent=1 // pred_region
      _
    $region41: #{enhanced_cnn_forward.1} parent=1 // pred_fallthru
      _
    // Predicated region
    $region42: #{enhanced_cnn_forward.1} parent=1 // pred_check
      _
    $region43: #{enhanced_cnn_forward.1} parent=1 // pred_check_branch
      %40 = sbr.rel (0) target = $region45
    $region44: #{enhanced_cnn_forward.1} parent=1 // pred_region
      _
    $region45: #{enhanced_cnn_forward.1} parent=1 // pred_fallthru
      _
    // Predicated region
    $region46: #{enhanced_cnn_forward.1} parent=1 // pred_check
      _
    $region47: #{enhanced_cnn_forward.1} parent=1 // pred_check_branch
      %42 = sbr.rel (0) target = $region49
    $region48: #{enhanced_cnn_forward.1} parent=1 // pred_region
      _
    $region49: #{enhanced_cnn_forward.1} parent=1 // pred_fallthru
      _
    // Predicated region
    $region50: #{enhanced_cnn_forward.1} parent=1 // pred_check
      _
    $region51: #{enhanced_cnn_forward.1} parent=1 // pred_check_branch
      %44 = sbr.rel (0) target = $region53
    $region52: #{enhanced_cnn_forward.1} parent=1 // pred_region
      _
    $region53: #{enhanced_cnn_forward.1} parent=1 // pred_fallthru
      _
    %v46 = vld [vmem:[%s0] sm:$0xff]
    %v47 = vld [vmem:[%s0 + $0x8] sm:$0xff]
    %v48 = vld [vmem:[%s0 + $0x10] sm:$0xff]
    %v49 = vld [vmem:[%s0 + $0x18] sm:$0xff]
    %vm54 = vcmask 1040384
    %v55 = vrot.slane %v46, 7
    %v56 = vrot.slane %v47, 7
    %v57 = vsel %vm54, %v55, %v56
    %v58 = vrot.slane %v48, 7
    %v59 = vrot.slane %v49, 7
    %v60 = vsel %vm54, %v58, %v59
    %v65 = vsel %vm54, 0.0, %v55
    %v66 = vsel %vm54, 0.0, %v58
    %v67 = vsel %vm54, %v56, 0.0
    %v68 = vsel %vm54, %v59, 0.0
    %v69 = vld [vmem:[%s1] sm:$0x3]
    %v70 = vld [vmem:[%s1 + $0x2] sm:$0x3]
    %v71 = vld [vmem:[%s1 + $0x4] sm:$0x3]
    %73 = vset.pattern.permute.xlu0 0
    %74 = vperm.xlu0 %73, %v65
    %v75 = vpop.permute.xlu0 %74
    %77 = vset.pattern.permute.xlu0 0
    %78 = vperm.xlu0 %77, %v57
    %v79 = vpop.permute.xlu0 %78
    %82 = vset.pattern.permute.xlu0 0
    %83 = vperm.xlu0 %82, %v66
    %v84 = vpop.permute.xlu0 %83
    %86 = vset.pattern.permute.xlu0 0
    %87 = vperm.xlu0 %86, %v60
    %v88 = vpop.permute.xlu0 %87
    %v90 = vlaneseq
    %v91 = vshrl.u32 %v90, 7
    %v92 = vsub.s32 0, %v91
    %v93 = vrot.slane %v69, %v92
    %v94 = vmul.f32 %v75, %v93
    %v95 = vmul.f32 %v79, %v93
    %v96 = vmul.f32 %v84, %v93
    %v97 = vmul.f32 %v88, %v93
    %v98 = vadd.f32 %v94, 0.0
    %v99 = vadd.f32 %v95, 0.0
    %v100 = vadd.f32 %v96, 0.0
    %v101 = vadd.f32 %v97, 0.0
    %102 = vset.pattern.permute.xlu0 1
    %103 = vperm.xlu0 %102, %v65
    %v104 = vpop.permute.xlu0 %103
    %106 = vset.pattern.permute.xlu0 1
    %107 = vperm.xlu0 %106, %v57
    %v108 = vpop.permute.xlu0 %107
    %110 = vset.pattern.permute.xlu0 1
    %111 = vperm.xlu0 %110, %v66
    %v112 = vpop.permute.xlu0 %111
    %114 = vset.pattern.permute.xlu0 1
    %115 = vperm.xlu0 %114, %v60
    %v116 = vpop.permute.xlu0 %115
    %v118 = vlaneseq
    %v119 = vshrl.u32 %v118, 7
    %v120 = vsub.s32 1, %v119
    %v121 = vrot.slane %v69, %v120
    %v122 = vmul.f32 %v104, %v121
    %v123 = vmul.f32 %v108, %v121
    %v124 = vmul.f32 %v112, %v121
    %v125 = vmul.f32 %v116, %v121
    %v126 = vadd.f32 %v98, %v122
    %v127 = vadd.f32 %v99, %v123
    %v128 = vadd.f32 %v100, %v124
    %v129 = vadd.f32 %v101, %v125
    %131 = vset.pattern.permute.xlu0 0
    %132 = vperm.xlu0 %131, %v67
    %v133 = vpop.permute.xlu0 %132
    %136 = vset.pattern.permute.xlu0 0
    %137 = vperm.xlu0 %136, %v68
    %v138 = vpop.permute.xlu0 %137
    %v140 = vlaneseq
    %v141 = vshrl.u32 %v140, 7
    %v142 = vsub.s32 0, %v141
    %v143 = vrot.slane %v70, %v142
    %v144 = vmul.f32 %v75, %v143
    %v145 = vmul.f32 %v79, %v143
    %v146 = vmul.f32 %v133, %v143
    %v147 = vmul.f32 %v84, %v143
    %v148 = vmul.f32 %v88, %v143
    %v149 = vmul.f32 %v138, %v143
    %vm156 = vcmask 1046528
    %v157 = vrot.slane %v144, 1
    %v158 = vrot.slane %v145, 1
    %v159 = vsel %vm156, %v157, %v158
    %v160 = vrot.slane %v146, 1
    %v161 = vsel %vm156, %v158, %v160
    %v162 = vrot.slane %v147, 1
    %v163 = vrot.slane %v148, 1
    %v164 = vsel %vm156, %v162, %v163
    %v165 = vrot.slane %v149, 1
    %v166 = vsel %vm156, %v163, %v165
    %v171 = vadd.f32 %v126, %v159
    %v172 = vadd.f32 %v127, %v161
    %v173 = vadd.f32 %v128, %v164
    %v174 = vadd.f32 %v129, %v166
    %175 = vset.pattern.permute.xlu0 1
    %176 = vperm.xlu0 %175, %v67
    %v177 = vpop.permute.xlu0 %176
    %179 = vset.pattern.permute.xlu0 1
    %180 = vperm.xlu0 %179, %v68
    %v181 = vpop.permute.xlu0 %180
    %v183 = vlaneseq
    %v184 = vshrl.u32 %v183, 7
    %v185 = vsub.s32 1, %v184
    %v186 = vrot.slane %v70, %v185
    %v187 = vmul.f32 %v104, %v186
    %v188 = vmul.f32 %v108, %v186
    %v189 = vmul.f32 %v177, %v186
    %v190 = vmul.f32 %v112, %v186
    %v191 = vmul.f32 %v116, %v186
    %v192 = vmul.f32 %v181, %v186
    %v199 = vrot.slane %v187, 1
    %v200 = vrot.slane %v188, 1
    %v201 = vsel %vm156, %v199, %v200
    %v202 = vrot.slane %v189, 1
    %v203 = vsel %vm156, %v200, %v202
    %v204 = vrot.slane %v190, 1
    %v205 = vrot.slane %v191, 1
    %v206 = vsel %vm156, %v204, %v205
    %v207 = vrot.slane %v192, 1
    %v208 = vsel %vm156, %v205, %v207
    %v213 = vadd.f32 %v171, %v201
    %v214 = vadd.f32 %v172, %v203
    %v215 = vadd.f32 %v173, %v206
    %v216 = vadd.f32 %v174, %v208
    %v217 = vlaneseq
    %v218 = vshrl.u32 %v217, 7
    %v219 = vsub.s32 0, %v218
    %v220 = vrot.slane %v71, %v219
    %v221 = vmul.f32 %v75, %v220
    %v222 = vmul.f32 %v79, %v220
    %v223 = vmul.f32 %v133, %v220
    %v224 = vmul.f32 %v84, %v220
    %v225 = vmul.f32 %v88, %v220
    %v226 = vmul.f32 %v138, %v220
    %vm233 = vcmask 1045504
    %v234 = vrot.slane %v221, 2
    %v235 = vrot.slane %v222, 2
    %v236 = vsel %vm233, %v234, %v235
    %v237 = vrot.slane %v223, 2
    %v238 = vsel %vm233, %v235, %v237
    %v239 = vrot.slane %v224, 2
    %v240 = vrot.slane %v225, 2
    %v241 = vsel %vm233, %v239, %v240
    %v242 = vrot.slane %v226, 2
    %v243 = vsel %vm233, %v240, %v242
    %v248 = vadd.f32 %v213, %v236
    %v249 = vadd.f32 %v214, %v238
    %v250 = vadd.f32 %v215, %v241
    %v251 = vadd.f32 %v216, %v243
    %v252 = vlaneseq
    %v253 = vshrl.u32 %v252, 7
    %v254 = vsub.s32 1, %v253
    %v255 = vrot.slane %v71, %v254
    %v256 = vmul.f32 %v104, %v255
    %v257 = vmul.f32 %v108, %v255
    %v258 = vmul.f32 %v177, %v255
    %v259 = vmul.f32 %v112, %v255
    %v260 = vmul.f32 %v116, %v255
    %v261 = vmul.f32 %v181, %v255
    %v268 = vrot.slane %v256, 2
    %v269 = vrot.slane %v257, 2
    %v270 = vsel %vm233, %v268, %v269
    %v271 = vrot.slane %v258, 2
    %v272 = vsel %vm233, %v269, %v271
    %v273 = vrot.slane %v259, 2
    %v274 = vrot.slane %v260, 2
    %v275 = vsel %vm233, %v273, %v274
    %v276 = vrot.slane %v261, 2
    %v277 = vsel %vm233, %v274, %v276
    %v282 = vadd.f32 %v248, %v270
    %v283 = vadd.f32 %v249, %v272
    %v284 = vadd.f32 %v250, %v275
    %v285 = vadd.f32 %v251, %v277
    %v286 = vld [vmem:[%s2] sm:$0x1]
    %v288 = vlaneseq
    %v289 = vshrl.u32 %v288, 7
    %v290 = vsub.s32 0, %v289
    %v291 = vrot.slane %v286, %v290
    %v293 = vadd.f32 %v282, %v291
    %v294 = vadd.f32 %v283, %v291
    %v295 = vadd.f32 %v284, %v291
    %v296 = vadd.f32 %v285, %v291
    %v297 = vmax.f32 %v293, 0.0
    %v298 = vmax.f32 %v294, 0.0
    %v299 = vmax.f32 %v295, 0.0
    %v300 = vmax.f32 %v296, 0.0
    %v305 = vcombine.high %v297, %v297
    %v307 = vunpack.c.l.s4 1983009808
    %v308 = vunpack.c.0.s8 %v307
    %v309 = vlaneseq
    %v310 = vshrl.u32 %v309, 7
    %v311 = vsub.s32 %v308, %v310
    %v312 = vrot.slane %v297, %v311
    %v314 = vunpack.c.l.s4 1983009808
    %v315 = vunpack.c.0.s8 %v314
    %v316 = vlaneseq
    %v317 = vshrl.u32 %v316, 7
    %v318 = vsub.s32 %v315, %v317
    %v319 = vrot.slane %v305, %v318
    %v320 = vcombine.high %v312, %v312
    %v321 = vcombine.high %v319, %v319
    %v322 = vcombine.high %v298, %v298
    %v324 = vunpack.c.l.s4 1983009808
    %v325 = vunpack.c.0.s8 %v324
    %v326 = vlaneseq
    %v327 = vshrl.u32 %v326, 7
    %v328 = vsub.s32 %v325, %v327
    %v329 = vrot.slane %v298, %v328
    %v331 = vunpack.c.l.s4 1983009808
    %v332 = vunpack.c.0.s8 %v331
    %v333 = vlaneseq
    %v334 = vshrl.u32 %v333, 7
    %v335 = vsub.s32 %v332, %v334
    %v336 = vrot.slane %v322, %v335
    %v337 = vcombine.high %v329, %v329
    %v338 = vcombine.high %v336, %v336
    %v339 = vcombine.high %v299, %v299
    %v341 = vunpack.c.l.s4 1983009808
    %v342 = vunpack.c.0.s8 %v341
    %v343 = vlaneseq
    %v344 = vshrl.u32 %v343, 7
    %v345 = vsub.s32 %v342, %v344
    %v346 = vrot.slane %v299, %v345
    %v348 = vunpack.c.l.s4 1983009808
    %v349 = vunpack.c.0.s8 %v348
    %v350 = vlaneseq
    %v351 = vshrl.u32 %v350, 7
    %v352 = vsub.s32 %v349, %v351
    %v353 = vrot.slane %v339, %v352
    %v354 = vcombine.high %v346, %v346
    %v355 = vcombine.high %v353, %v353
    %v356 = vcombine.high %v300, %v300
    %v358 = vunpack.c.l.s4 1983009808
    %v359 = vunpack.c.0.s8 %v358
    %v360 = vlaneseq
    %v361 = vshrl.u32 %v360, 7
    %v362 = vsub.s32 %v359, %v361
    %v363 = vrot.slane %v300, %v362
    %v365 = vunpack.c.l.s4 1983009808
    %v366 = vunpack.c.0.s8 %v365
    %v367 = vlaneseq
    %v368 = vshrl.u32 %v367, 7
    %v369 = vsub.s32 %v366, %v368
    %v370 = vrot.slane %v356, %v369
    %v371 = vcombine.high %v363, %v363
    %v372 = vcombine.high %v370, %v370
    %vm389 = vcmask 254976
    %v390 = vsel %vm389, %v312, -inf
    %v391 = vrot.slane %v390, 4
    %v392 = vmax.f32 %v390, %v391
    %v393 = vrot.slane %v392, 2
    %v394 = vmax.f32 %v392, %v393
    %v395 = vrot.slane %v394, 1
    %v396 = vmax.f32 %v394, %v395
    %v397 = vsel %vm389, %v320, -inf
    %v398 = vrot.slane %v397, 4
    %v399 = vmax.f32 %v397, %v398
    %v400 = vrot.slane %v399, 2
    %v401 = vmax.f32 %v399, %v400
    %v402 = vrot.slane %v401, 1
    %v403 = vmax.f32 %v401, %v402
    %v404 = vsel %vm389, %v319, -inf
    %v405 = vrot.slane %v404, 4
    %v406 = vmax.f32 %v404, %v405
    %v407 = vrot.slane %v406, 2
    %v408 = vmax.f32 %v406, %v407
    %v409 = vrot.slane %v408, 1
    %v410 = vmax.f32 %v408, %v409
    %v411 = vsel %vm389, %v321, -inf
    %v412 = vrot.slane %v411, 4
    %v413 = vmax.f32 %v411, %v412
    %v414 = vrot.slane %v413, 2
    %v415 = vmax.f32 %v413, %v414
    %v416 = vrot.slane %v415, 1
    %v417 = vmax.f32 %v415, %v416
    %v418 = vsel %vm389, %v329, -inf
    %v419 = vrot.slane %v418, 4
    %v420 = vmax.f32 %v418, %v419
    %v421 = vrot.slane %v420, 2
    %v422 = vmax.f32 %v420, %v421
    %v423 = vrot.slane %v422, 1
    %v424 = vmax.f32 %v422, %v423
    %v425 = vsel %vm389, %v337, -inf
    %v426 = vrot.slane %v425, 4
    %v427 = vmax.f32 %v425, %v426
    %v428 = vrot.slane %v427, 2
    %v429 = vmax.f32 %v427, %v428
    %v430 = vrot.slane %v429, 1
    %v431 = vmax.f32 %v429, %v430
    %v432 = vsel %vm389, %v336, -inf
    %v433 = vrot.slane %v432, 4
    %v434 = vmax.f32 %v432, %v433
    %v435 = vrot.slane %v434, 2
    %v436 = vmax.f32 %v434, %v435
    %v437 = vrot.slane %v436, 1
    %v438 = vmax.f32 %v436, %v437
    %v439 = vsel %vm389, %v338, -inf
    %v440 = vrot.slane %v439, 4
    %v441 = vmax.f32 %v439, %v440
    %v442 = vrot.slane %v441, 2
    %v443 = vmax.f32 %v441, %v442
    %v444 = vrot.slane %v443, 1
    %v445 = vmax.f32 %v443, %v444
    %v446 = vsel %vm389, %v346, -inf
    %v447 = vrot.slane %v446, 4
    %v448 = vmax.f32 %v446, %v447
    %v449 = vrot.slane %v448, 2
    %v450 = vmax.f32 %v448, %v449
    %v451 = vrot.slane %v450, 1
    %v452 = vmax.f32 %v450, %v451
    %v453 = vsel %vm389, %v354, -inf
    %v454 = vrot.slane %v453, 4
    %v455 = vmax.f32 %v453, %v454
    %v456 = vrot.slane %v455, 2
    %v457 = vmax.f32 %v455, %v456
    %v458 = vrot.slane %v457, 1
    %v459 = vmax.f32 %v457, %v458
    %v460 = vsel %vm389, %v353, -inf
    %v461 = vrot.slane %v460, 4
    %v462 = vmax.f32 %v460, %v461
    %v463 = vrot.slane %v462, 2
    %v464 = vmax.f32 %v462, %v463
    %v465 = vrot.slane %v464, 1
    %v466 = vmax.f32 %v464, %v465
    %v467 = vsel %vm389, %v355, -inf
    %v468 = vrot.slane %v467, 4
    %v469 = vmax.f32 %v467, %v468
    %v470 = vrot.slane %v469, 2
    %v471 = vmax.f32 %v469, %v470
    %v472 = vrot.slane %v471, 1
    %v473 = vmax.f32 %v471, %v472
    %v474 = vsel %vm389, %v363, -inf
    %v475 = vrot.slane %v474, 4
    %v476 = vmax.f32 %v474, %v475
    %v477 = vrot.slane %v476, 2
    %v478 = vmax.f32 %v476, %v477
    %v479 = vrot.slane %v478, 1
    %v480 = vmax.f32 %v478, %v479
    %v481 = vsel %vm389, %v371, -inf
    %v482 = vrot.slane %v481, 4
    %v483 = vmax.f32 %v481, %v482
    %v484 = vrot.slane %v483, 2
    %v485 = vmax.f32 %v483, %v484
    %v486 = vrot.slane %v485, 1
    %v487 = vmax.f32 %v485, %v486
    %v488 = vsel %vm389, %v370, -inf
    %v489 = vrot.slane %v488, 4
    %v490 = vmax.f32 %v488, %v489
    %v491 = vrot.slane %v490, 2
    %v492 = vmax.f32 %v490, %v491
    %v493 = vrot.slane %v492, 1
    %v494 = vmax.f32 %v492, %v493
    %v495 = vsel %vm389, %v372, -inf
    %v496 = vrot.slane %v495, 4
    %v497 = vmax.f32 %v495, %v496
    %v498 = vrot.slane %v497, 2
    %v499 = vmax.f32 %v497, %v498
    %v500 = vrot.slane %v499, 1
    %v501 = vmax.f32 %v499, %v500
    %vm518 = vcmask 1042434
    %v519 = vsel %vm518, %v403, %v396
    %vm520 = vcmask 1043459
    %v521 = vsel %vm520, %v410, %v519
    %vm522 = vcmask 1044484
    %v523 = vsel %vm522, %v417, %v521
    %vm524 = vcmask 1045509
    %v525 = vsel %vm524, %v424, %v523
    %vm526 = vcmask 1046534
    %v527 = vsel %vm526, %v431, %v525
    %vm528 = vcmask 1047559
    %v529 = vsel %vm528, %v438, %v527
    %v530 = vsel %vm518, %v459, %v452
    %v531 = vsel %vm520, %v466, %v530
    %v532 = vsel %vm522, %v473, %v531
    %v533 = vsel %vm524, %v480, %v532
    %v534 = vsel %vm526, %v487, %v533
    %v535 = vsel %vm528, %v494, %v534
    %v540 = vsel %vm54, 0.0, %v529
    %v541 = vsel %vm54, 0.0, %v535
    %v542 = vsel %vm54, %v445, 0.0
    %v543 = vsel %vm54, %v501, 0.0
    %v548 = vrot.slane %v540, 1
    %v549 = vrot.slane %v542, 1
    %v550 = vsel %vm156, %v548, %v549
    %v551 = vrot.slane %v541, 1
    %v552 = vrot.slane %v543, 1
    %v553 = vsel %vm156, %v551, %v552
    %554 = vrot.lane.b32.xlu0 %v550, 32
    %v555 = vpop.permute.xlu0 %554
    %556 = vrot.lane.b32.xlu0 %v553, 32
    %v557 = vpop.permute.xlu0 %556
    %v560 = vrot.slane %v540, 2
    %v561 = vrot.slane %v542, 2
    %v562 = vsel %vm233, %v560, %v561
    %v563 = vrot.slane %v541, 2
    %v564 = vrot.slane %v543, 2
    %v565 = vsel %vm233, %v563, %v564
    %566 = vrot.lane.b32.xlu0 %v562, 64
    %v567 = vpop.permute.xlu0 %566
    %568 = vrot.lane.b32.xlu0 %v565, 64
    %v569 = vpop.permute.xlu0 %568
    %vm572 = vcmask 261120
    %v573 = vsel %vm572, %v540, %v555
    %v574 = vsel %vm572, %v541, %v557
    %vm575 = vcmask 523264
    %v576 = vsel %vm575, %v573, %v567
    %v577 = vsel %vm575, %v574, %v569
    %v578 = vpack.c.bf16 %v577, %v576
    %v579 = vld [vmem:[%s3] sm:$0xf]
    %v580 = vld [vmem:[%s3 + $0x4] sm:$0xf]
    %v581 = vld [vmem:[%s3 + $0x8] sm:$0xf]
    %v582 = vld [vmem:[%s3 + $0xc] sm:$0xf]
    %v583 = vld [vmem:[%s3 + $0x10] sm:$0xf]
    %v584 = vld [vmem:[%s3 + $0x14] sm:$0xf]
    %v585 = vld [vmem:[%s3 + $0x18] sm:$0xf]
    %v586 = vld [vmem:[%s3 + $0x1c] sm:$0xf]
    %v587 = vld [vmem:[%s3 + $0x20] sm:$0xf]
    %v588 = vld [vmem:[%s3 + $0x24] sm:$0xf]
    %v589 = vld [vmem:[%s3 + $0x28] sm:$0xf]
    %v590 = vld [vmem:[%s3 + $0x2c] sm:$0xf]
    %v591 = vld [vmem:[%s4] sm:$0x1]
    %v593 = vlaneseq
    %v594 = vshrl.u32 %v593, 7
    %v595 = vsub.s32 0, %v594
    %v596 = vrot.slane %v591, %v595
    %v610 = vunpack.c.l.b16 %v579
    %v611 = vunpack.c.l.b16 %v580
    %v612 = vunpack.c.l.b16 %v581
    %v613 = vunpack.c.l.b16 %v582
    %v614 = vunpack.c.l.b16 %v583
    %v615 = vunpack.c.l.b16 %v584
    %v616 = vunpack.c.l.b16 %v585
    %v617 = vunpack.c.l.b16 %v586
    %v618 = vunpack.c.l.b16 %v587
    %v619 = vunpack.c.l.b16 %v588
    %v620 = vunpack.c.l.b16 %v589
    %v621 = vunpack.c.l.b16 %v590
    %v622 = vpack.c.b16 %v611, %v610
    %v623 = vpack.c.b16 %v613, %v612
    %v624 = vpack.c.b16 %v615, %v614
    %v625 = vpack.c.b16 %v617, %v616
    %v626 = vpack.c.b16 %v619, %v618
    %v627 = vpack.c.b16 %v621, %v620
    %vm634 = vcmask 785408
    %v636 = vsel %vm634, %v578, 0
    %638 = vmatprep.subr.bf16.mxu0 0
    %639 = vmatpush1.bf16.msra.mxu0 %v622
    %640 = vmatprep.subr.bf16.mxu0 0
    %641 = vmatpush1.bf16.msra.mxu0 %v623
    %642 = vmatprep.subr.bf16.mxu0 0
    %643 = vmatpush1.bf16.msra.mxu0 %v624
    %644 = vmatprep.subr.bf16.mxu0 0
    %645 = vmatpush1.bf16.msra.mxu0 %v625
    %646 = vmatprep.subr.bf16.mxu0 0
    %647 = vmatpush1.bf16.msra.mxu0 %v626
    %648 = vmatprep.subr.bf16.mxu0 0
    %649 = vmatpush1.bf16.msra.mxu0 %v627
    %650 = vmatprep.subr.bf16.mxu0 0
    %651 = vmatpush1.bf16.msra.mxu0 0
    %652 = vmatprep.subr.bf16.mxu0 0
    %653 = vmatpush1.bf16.msra.mxu0 0
    %654 = vmatprep.subr.bf16.mxu0 0
    %655 = vmatpush1.bf16.msra.mxu0 0
    %656 = vmatprep.subr.bf16.mxu0 0
    %657 = vmatpush1.bf16.msra.mxu0 0
    %658 = vmatprep.subr.bf16.mxu0 0
    %659 = vmatpush1.bf16.msra.mxu0 0
    %660 = vmatprep.subr.bf16.mxu0 0
    %661 = vmatpush1.bf16.msra.mxu0 0
    %662 = vmatprep.subr.bf16.mxu0 0
    %663 = vmatpush1.bf16.msra.mxu0 0
    %664 = vmatprep.subr.bf16.mxu0 0
    %665 = vmatpush1.bf16.msra.mxu0 0
    %666 = vmatprep.subr.bf16.mxu0 0
    %667 = vmatpush1.bf16.msra.mxu0 0
    %668 = vmatprep.subr.bf16.mxu0 0
    %669 = vmatpush1.bf16.msra.mxu0 0
    %670 = vmatprep.mubr.bf16.mxu0 0
    %671 = vmatmul.mubr.bf16.gmra.mrb[0].mxu0 %v636
    %v672 = vpop.f32.mrb[0].mxu0
    %v673 = vadd.f32 %v596, %v672
    %v674 = vpop.f32.mrb[0].mxu0
    %v675 = vpop.f32.mrb[0].mxu0
    %v676 = vadd.f32 %v596, %v675
    %v677 = vpop.f32.mrb[0].mxu0
    %678 = vdwg.mxu0
    %v679 = vmax.f32 %v673, 0.0
    %v680 = vmax.f32 %v676, 0.0
    %v683 = vcombine.high %v679, %v679
    %v685 = vunpack.c.l.s4 1983009808
    %v686 = vunpack.c.0.s8 %v685
    %v687 = vlaneseq
    %v688 = vshrl.u32 %v687, 7
    %v689 = vsub.s32 %v686, %v688
    %v690 = vrot.slane %v679, %v689
    %v692 = vunpack.c.l.s4 1983009808
    %v693 = vunpack.c.0.s8 %v692
    %v694 = vlaneseq
    %v695 = vshrl.u32 %v694, 7
    %v696 = vsub.s32 %v693, %v695
    %v697 = vrot.slane %v683, %v696
    %v698 = vcombine.high %v690, %v690
    %v699 = vcombine.high %v697, %v697
    %v700 = vcombine.high %v680, %v680
    %v702 = vunpack.c.l.s4 1983009808
    %v703 = vunpack.c.0.s8 %v702
    %v704 = vlaneseq
    %v705 = vshrl.u32 %v704, 7
    %v706 = vsub.s32 %v703, %v705
    %v707 = vrot.slane %v680, %v706
    %v709 = vunpack.c.l.s4 1983009808
    %v710 = vunpack.c.0.s8 %v709
    %v711 = vlaneseq
    %v712 = vshrl.u32 %v711, 7
    %v713 = vsub.s32 %v710, %v712
    %v714 = vrot.slane %v700, %v713
    %v715 = vcombine.high %v707, %v707
    %v716 = vcombine.high %v714, %v714
    %vm725 = vcmask 517120
    %v726 = vsel %vm725, %v690, -inf
    %v727 = vrot.slane %v726, 4
    %v728 = vmax.f32 %v726, %v727
    %v729 = vrot.slane %v728, 2
    %v730 = vmax.f32 %v728, %v729
    %v731 = vrot.slane %v730, 1
    %v732 = vmax.f32 %v730, %v731
    %v733 = vsel %vm725, %v698, -inf
    %v734 = vrot.slane %v733, 4
    %v735 = vmax.f32 %v733, %v734
    %v736 = vrot.slane %v735, 2
    %v737 = vmax.f32 %v735, %v736
    %v738 = vrot.slane %v737, 1
    %v739 = vmax.f32 %v737, %v738
    %v740 = vsel %vm725, %v697, -inf
    %v741 = vrot.slane %v740, 4
    %v742 = vmax.f32 %v740, %v741
    %v743 = vrot.slane %v742, 2
    %v744 = vmax.f32 %v742, %v743
    %v745 = vrot.slane %v744, 1
    %v746 = vmax.f32 %v744, %v745
    %v747 = vsel %vm725, %v699, -inf
    %v748 = vrot.slane %v747, 4
    %v749 = vmax.f32 %v747, %v748
    %v750 = vrot.slane %v749, 2
    %v751 = vmax.f32 %v749, %v750
    %v752 = vrot.slane %v751, 1
    %v753 = vmax.f32 %v751, %v752
    %v754 = vsel %vm725, %v707, -inf
    %v755 = vrot.slane %v754, 4
    %v756 = vmax.f32 %v754, %v755
    %v757 = vrot.slane %v756, 2
    %v758 = vmax.f32 %v756, %v757
    %v759 = vrot.slane %v758, 1
    %v760 = vmax.f32 %v758, %v759
    %v761 = vsel %vm725, %v715, -inf
    %v762 = vrot.slane %v761, 4
    %v763 = vmax.f32 %v761, %v762
    %v764 = vrot.slane %v763, 2
    %v765 = vmax.f32 %v763, %v764
    %v766 = vrot.slane %v765, 1
    %v767 = vmax.f32 %v765, %v766
    %v768 = vsel %vm725, %v714, -inf
    %v769 = vrot.slane %v768, 4
    %v770 = vmax.f32 %v768, %v769
    %v771 = vrot.slane %v770, 2
    %v772 = vmax.f32 %v770, %v771
    %v773 = vrot.slane %v772, 1
    %v774 = vmax.f32 %v772, %v773
    %v775 = vsel %vm725, %v716, -inf
    %v776 = vrot.slane %v775, 4
    %v777 = vmax.f32 %v775, %v776
    %v778 = vrot.slane %v777, 2
    %v779 = vmax.f32 %v777, %v778
    %v780 = vrot.slane %v779, 1
    %v781 = vmax.f32 %v779, %v780
    %v790 = vsel %vm518, %v739, %v732
    %v791 = vsel %vm520, %v746, %v790
    %v792 = vsel %vm522, %v753, %v791
    %v793 = vsel %vm518, %v767, %v760
    %v794 = vsel %vm520, %v774, %v793
    %v795 = vsel %vm522, %v781, %v794
    %v798 = vsel %vm54, 0.0, %v792
    %v799 = vsel %vm54, 0.0, %v795
    %vm800 = vcmask 1044480
    %v801 = vsel %vm800, %v798, 0.0
    %v802 = vsel %vm800, %v799, 0.0
    %v805 = vrot.slane %v801, 1
    %v806 = vrot.slane %v802, 1
    %807 = vrot.lane.b32.xlu0 %v805, 64
    %v808 = vpop.permute.xlu0 %807
    %809 = vrot.lane.b32.xlu0 %v806, 64
    %v810 = vpop.permute.xlu0 %809
    %v813 = vrot.slane %v801, 2
    %v814 = vrot.slane %v802, 2
    %v815 = vsel %vm575, %v801, %v808
    %v816 = vsel %vm575, %v802, %v810
    %v819 = vcombine.low %v815, %v813
    %v820 = vcombine.low %v816, %v814
    %v821 = vcombine.low %v819, %v820
    %v822 = vcombine.high %v819, %v820
    %v825 = vpack.c.bf16 %v821, %v821
    %v826 = vpack.c.bf16 %v822, %v822
    %v827 = vld [vmem:[%s5] sm:$0xf]
    %v828 = vld [vmem:[%s5 + $0x4] sm:$0xf]
    %v829 = vld [vmem:[%s5 + $0x8] sm:$0xf]
    %v830 = vld [vmem:[%s5 + $0xc] sm:$0xf]
    %v831 = vld [vmem:[%s5 + $0x10] sm:$0xf]
    %v832 = vld [vmem:[%s5 + $0x14] sm:$0xf]
    %v833 = vld [vmem:[%s5 + $0x18] sm:$0xf]
    %v834 = vld [vmem:[%s5 + $0x1c] sm:$0xf]
    %v835 = vld [vmem:[%s5 + $0x20] sm:$0xf]
    %v836 = vld [vmem:[%s5 + $0x24] sm:$0xf]
    %v837 = vld [vmem:[%s5 + $0x28] sm:$0xf]
    %v838 = vld [vmem:[%s5 + $0x2c] sm:$0xf]
    %v839 = vld [vmem:[%s5 + $0x30] sm:$0xf]
    %v840 = vld [vmem:[%s5 + $0x34] sm:$0xf]
    %v841 = vld [vmem:[%s5 + $0x38] sm:$0xf]
    %v842 = vld [vmem:[%s5 + $0x3c] sm:$0xf]
    %v843 = vld [vmem:[%s5 + $0x40] sm:$0xf]
    %v844 = vld [vmem:[%s5 + $0x44] sm:$0xf]
    %v845 = vld [vmem:[%s5 + $0x48] sm:$0xf]
    %v846 = vld [vmem:[%s5 + $0x4c] sm:$0xf]
    %v847 = vld [vmem:[%s5 + $0x50] sm:$0xf]
    %v848 = vld [vmem:[%s5 + $0x54] sm:$0xf]
    %v849 = vld [vmem:[%s5 + $0x58] sm:$0xf]
    %v850 = vld [vmem:[%s5 + $0x5c] sm:$0xf]
    %v851 = vld [vmem:[%s6] sm:$0x1]
    %v853 = vlaneseq
    %v854 = vshrl.u32 %v853, 7
    %v855 = vsub.s32 0, %v854
    %v856 = vrot.slane %v851, %v855
    %v882 = vunpack.c.l.b16 %v827
    %v883 = vunpack.c.l.b16 %v828
    %v884 = vunpack.c.l.b16 %v829
    %v885 = vunpack.c.l.b16 %v830
    %v886 = vunpack.c.l.b16 %v831
    %v887 = vunpack.c.l.b16 %v832
    %v888 = vunpack.c.l.b16 %v833
    %v889 = vunpack.c.l.b16 %v834
    %v890 = vunpack.c.l.b16 %v835
    %v891 = vunpack.c.l.b16 %v836
    %v892 = vunpack.c.l.b16 %v837
    %v893 = vunpack.c.l.b16 %v838
    %v894 = vunpack.c.l.b16 %v839
    %v895 = vunpack.c.l.b16 %v840
    %v896 = vunpack.c.l.b16 %v841
    %v897 = vunpack.c.l.b16 %v842
    %v898 = vunpack.c.l.b16 %v843
    %v899 = vunpack.c.l.b16 %v844
    %v900 = vunpack.c.l.b16 %v845
    %v901 = vunpack.c.l.b16 %v846
    %v902 = vunpack.c.l.b16 %v847
    %v903 = vunpack.c.l.b16 %v848
    %v904 = vunpack.c.l.b16 %v849
    %v905 = vunpack.c.l.b16 %v850
    %v906 = vpack.c.b16 %v883, %v882
    %v907 = vpack.c.b16 %v885, %v884
    %v908 = vpack.c.b16 %v887, %v886
    %v909 = vpack.c.b16 %v889, %v888
    %v910 = vpack.c.b16 %v891, %v890
    %v911 = vpack.c.b16 %v893, %v892
    %v912 = vpack.c.b16 %v895, %v894
    %v913 = vpack.c.b16 %v897, %v896
    %v914 = vpack.c.b16 %v899, %v898
    %v915 = vpack.c.b16 %v901, %v900
    %v916 = vpack.c.b16 %v903, %v902
    %v917 = vpack.c.b16 %v905, %v904
    %v931 = vsel %vm575, %v826, 0
    %933 = vmatprep.subr.bf16.mxu0 0
    %934 = vmatpush1.bf16.msra.mxu0 %v906
    %935 = vmatprep.subr.bf16.mxu0 0
    %936 = vmatpush1.bf16.msra.mxu0 %v907
    %937 = vmatprep.subr.bf16.mxu0 0
    %938 = vmatpush1.bf16.msra.mxu0 %v908
    %939 = vmatprep.subr.bf16.mxu0 0
    %940 = vmatpush1.bf16.msra.mxu0 %v909
    %941 = vmatprep.subr.bf16.mxu0 0
    %942 = vmatpush1.bf16.msra.mxu0 %v910
    %943 = vmatprep.subr.bf16.mxu0 0
    %944 = vmatpush1.bf16.msra.mxu0 %v911
    %945 = vmatprep.subr.bf16.mxu0 0
    %946 = vmatpush1.bf16.msra.mxu0 %v912
    %947 = vmatprep.subr.bf16.mxu0 0
    %948 = vmatpush1.bf16.msra.mxu0 %v913
    %949 = vmatprep.subr.bf16.mxu0 0
    %950 = vmatpush1.bf16.msra.mxu0 %v914
    %951 = vmatprep.subr.bf16.mxu0 0
    %952 = vmatpush1.bf16.msra.mxu0 %v915
    %953 = vmatprep.subr.bf16.mxu0 0
    %954 = vmatpush1.bf16.msra.mxu0 %v916
    %955 = vmatprep.subr.bf16.mxu0 0
    %956 = vmatpush1.bf16.msra.mxu0 %v917
    %957 = vmatprep.subr.bf16.mxu0 0
    %958 = vmatpush1.bf16.msra.mxu0 0
    %959 = vmatprep.subr.bf16.mxu0 0
    %960 = vmatpush1.bf16.msra.mxu0 0
    %961 = vmatprep.subr.bf16.mxu0 0
    %962 = vmatpush1.bf16.msra.mxu0 0
    %963 = vmatprep.subr.bf16.mxu0 0
    %964 = vmatpush1.bf16.msra.mxu0 0
    %965 = vmatprep.mubr.bf16.mxu0 %v931
    %966 = vmatmul.mubr.bf16.gmra.mrb[0].mxu0 %v825
    %v967 = vpop.f32.mrb[0].mxu0
    %v968 = vadd.f32 %v856, %v967
    %v969 = vpop.f32.mrb[0].mxu0
    %v970 = vpop.f32.mrb[0].mxu0
    %v971 = vpop.f32.mrb[0].mxu0
    %972 = vdwg.mxu0
    %v973 = vmax.f32 %v968, 0.0
    %v975 = vcombine.high %v973, %v973
    %v977 = vunpack.c.l.s4 1983009808
    %v978 = vunpack.c.0.s8 %v977
    %v979 = vlaneseq
    %v980 = vshrl.u32 %v979, 7
    %v981 = vsub.s32 %v978, %v980
    %v982 = vrot.slane %v973, %v981
    %v984 = vunpack.c.l.s4 1983009808
    %v985 = vunpack.c.0.s8 %v984
    %v986 = vlaneseq
    %v987 = vshrl.u32 %v986, 7
    %v988 = vsub.s32 %v985, %v987
    %v989 = vrot.slane %v975, %v988
    %v990 = vcombine.high %v982, %v982
    %v991 = vcombine.high %v989, %v989
    %vm996 = vcmask 1041408
    %v997 = vsel %vm996, %v982, -inf
    %v998 = vrot.slane %v997, 4
    %v999 = vmax.f32 %v997, %v998
    %v1000 = vrot.slane %v999, 2
    %v1001 = vmax.f32 %v999, %v1000
    %v1002 = vrot.slane %v1001, 1
    %v1003 = vmax.f32 %v1001, %v1002
    %v1004 = vsel %vm996, %v990, -inf
    %v1005 = vrot.slane %v1004, 4
    %v1006 = vmax.f32 %v1004, %v1005
    %v1007 = vrot.slane %v1006, 2
    %v1008 = vmax.f32 %v1006, %v1007
    %v1009 = vrot.slane %v1008, 1
    %v1010 = vmax.f32 %v1008, %v1009
    %v1011 = vsel %vm996, %v989, -inf
    %v1012 = vrot.slane %v1011, 4
    %v1013 = vmax.f32 %v1011, %v1012
    %v1014 = vrot.slane %v1013, 2
    %v1015 = vmax.f32 %v1013, %v1014
    %v1016 = vrot.slane %v1015, 1
    %v1017 = vmax.f32 %v1015, %v1016
    %v1018 = vsel %vm996, %v991, -inf
    %v1019 = vrot.slane %v1018, 4
    %v1020 = vmax.f32 %v1018, %v1019
    %v1021 = vrot.slane %v1020, 2
    %v1022 = vmax.f32 %v1020, %v1021
    %v1023 = vrot.slane %v1022, 1
    %v1024 = vmax.f32 %v1022, %v1023
    %v1029 = vsel %vm518, %v1010, %v1003
    %v1030 = vsel %vm518, %v1024, %v1017
    %v1033 = vsel %vm54, 0.0, %v1029
    %v1034 = vsel %vm54, 0.0, %v1030
    %vm1035 = vcmask 1042432
    %v1036 = vsel %vm1035, %v1033, 0.0
    %v1037 = vsel %vm1035, %v1034, 0.0
    %v1040 = vrot.slane %v1036, 1
    %v1041 = vrot.slane %v1037, 1
    %v1042 = vrot.slane %v1036, 2
    %v1043 = vrot.slane %v1037, 2
    %v1044 = vcombine.low %v1036, %v1040
    %v1046 = vunpack.c.l.s4 1983009808
    %v1047 = vunpack.c.0.s8 %v1046
    %v1048 = vlaneseq
    %v1049 = vshrl.u32 %v1048, 7
    %v1050 = vsub.s32 %v1047, %v1049
    %v1051 = vrot.slane %v1044, %v1050
    %v1053 = vunpack.c.l.s4 1983009808
    %v1054 = vunpack.c.0.s8 %v1053
    %v1055 = vlaneseq
    %v1056 = vshrl.u32 %v1055, 7
    %v1057 = vsub.s32 %v1054, %v1056
    %v1058 = vrot.slane %v1042, %v1057
    %v1059 = vcombine.low %v1051, %v1058
    %v1060 = vcombine.low %v1037, %v1041
    %v1062 = vunpack.c.l.s4 1983009808
    %v1063 = vunpack.c.0.s8 %v1062
    %v1064 = vlaneseq
    %v1065 = vshrl.u32 %v1064, 7
    %v1066 = vsub.s32 %v1063, %v1065
    %v1067 = vrot.slane %v1060, %v1066
    %v1069 = vunpack.c.l.s4 1983009808
    %v1070 = vunpack.c.0.s8 %v1069
    %v1071 = vlaneseq
    %v1072 = vshrl.u32 %v1071, 7
    %v1073 = vsub.s32 %v1070, %v1072
    %v1074 = vrot.slane %v1043, %v1073
    %v1075 = vcombine.low %v1067, %v1074
    %v1076 = vcombine.low %v1059, %v1075
    %v1077 = vcombine.high %v1059, %v1075
    %v1079 = vunpack.c.l.s4 1983009808
    %v1080 = vunpack.c.0.s8 %v1079
    %v1081 = vlaneseq
    %v1082 = vshrl.u32 %v1081, 7
    %v1083 = vsub.s32 %v1080, %v1082
    %v1084 = vrot.slane %v1076, %v1083
    %v1086 = vunpack.c.l.s4 1983009808
    %v1087 = vunpack.c.0.s8 %v1086
    %v1088 = vlaneseq
    %v1089 = vshrl.u32 %v1088, 7
    %v1090 = vsub.s32 %v1087, %v1089
    %v1091 = vrot.slane %v1077, %v1090
    %v1092 = vcombine.high %v1084, %v1084
    %v1096 = vpack.c.bf16 %v1084, %v1084
    %v1097 = vpack.c.bf16 %v1092, %v1092
    %v1098 = vpack.c.bf16 %v1091, %v1091
    %v1099 = vld [vmem:[%s7] sm:$0xff]
    %v1100 = vld [vmem:[%s7 + $0x8] sm:$0xff]
    %v1101 = vld [vmem:[%s7 + $0x10] sm:$0xff]
    %v1102 = vld [vmem:[%s7 + $0x18] sm:$0xff]
    %v1103 = vld [vmem:[%s7 + $0x20] sm:$0xff]
    %v1104 = vld [vmem:[%s7 + $0x28] sm:$0xff]
    %v1105 = vld [vmem:[%s7 + $0x30] sm:$0xff]
    %v1106 = vld [vmem:[%s7 + $0x38] sm:$0xff]
    %v1107 = vld [vmem:[%s7 + $0x40] sm:$0xff]
    %v1108 = vld [vmem:[%s7 + $0x48] sm:$0xff]
    %v1109 = vld [vmem:[%s7 + $0x50] sm:$0xff]
    %v1110 = vld [vmem:[%s7 + $0x58] sm:$0xff]
    %v1111 = vld [vmem:[%s7 + $0x60] sm:$0xff]
    %v1112 = vld [vmem:[%s7 + $0x68] sm:$0xff]
    %v1113 = vld [vmem:[%s7 + $0x70] sm:$0xff]
    %v1114 = vld [vmem:[%s7 + $0x78] sm:$0xff]
    %v1115 = vld [vmem:[%s7 + $0x80] sm:$0xff]
    %v1116 = vld [vmem:[%s7 + $0x88] sm:$0xff]
    %v1117 = vld [vmem:[%s7 + $0x90] sm:$0xff]
    %v1118 = vld [vmem:[%s7 + $0x98] sm:$0xff]
    %v1119 = vld [vmem:[%s7 + $0xa0] sm:$0xff]
    %v1120 = vld [vmem:[%s7 + $0xa8] sm:$0xff]
    %v1121 = vld [vmem:[%s7 + $0xb0] sm:$0xff]
    %v1122 = vld [vmem:[%s7 + $0xb8] sm:$0xff]
    %v1123 = vld [vmem:[%s7 + $0xc0] sm:$0xff]
    %v1124 = vld [vmem:[%s7 + $0xc8] sm:$0xff]
    %v1125 = vld [vmem:[%s7 + $0xd0] sm:$0xff]
    %v1126 = vld [vmem:[%s7 + $0xd8] sm:$0xff]
    %v1127 = vld [vmem:[%s7 + $0xe0] sm:$0xff]
    %v1128 = vld [vmem:[%s7 + $0xe8] sm:$0xff]
    %v1129 = vld [vmem:[%s7 + $0xf0] sm:$0xff]
    %v1130 = vld [vmem:[%s7 + $0xf8] sm:$0xff]
    %v1131 = vld [vmem:[%s7 + $0x100] sm:$0xff]
    %v1132 = vld [vmem:[%s7 + $0x108] sm:$0xff]
    %v1133 = vld [vmem:[%s7 + $0x110] sm:$0xff]
    %v1134 = vld [vmem:[%s7 + $0x118] sm:$0xff]
    %v1135 = vld [vmem:[%s7 + $0x120] sm:$0xff]
    %v1136 = vld [vmem:[%s7 + $0x128] sm:$0xff]
    %v1137 = vld [vmem:[%s7 + $0x130] sm:$0xff]
    %v1138 = vld [vmem:[%s7 + $0x138] sm:$0xff]
    %v1139 = vld [vmem:[%s7 + $0x140] sm:$0xff]
    %v1140 = vld [vmem:[%s7 + $0x148] sm:$0xff]
    %v1141 = vld [vmem:[%s7 + $0x150] sm:$0xff]
    %v1142 = vld [vmem:[%s7 + $0x158] sm:$0xff]
    %v1143 = vld [vmem:[%s7 + $0x160] sm:$0xff]
    %v1144 = vld [vmem:[%s7 + $0x168] sm:$0xff]
    %v1145 = vld [vmem:[%s7 + $0x170] sm:$0xff]
    %v1146 = vld [vmem:[%s7 + $0x178] sm:$0xff]
    %v1147 = vld [vmem:[%s8] sm:$0x3]
    %v1149 = vlaneseq
    %v1150 = vshrl.u32 %v1149, 7
    %v1151 = vsub.s32 0, %v1150
    %v1152 = vrot.slane %v1147, %v1151
    %v1153 = vlaneseq
    %v1154 = vshrl.u32 %v1153, 7
    %v1155 = vsub.s32 1, %v1154
    %v1156 = vrot.slane %v1147, %v1155
    %v1207 = vunpack.c.l.b16 %v1099
    %v1208 = vunpack.c.h.b16 %v1099
    %v1209 = vunpack.c.l.b16 %v1100
    %v1210 = vunpack.c.h.b16 %v1100
    %v1211 = vunpack.c.l.b16 %v1101
    %v1212 = vunpack.c.h.b16 %v1101
    %v1213 = vunpack.c.l.b16 %v1102
    %v1214 = vunpack.c.h.b16 %v1102
    %v1215 = vunpack.c.l.b16 %v1103
    %v1216 = vunpack.c.h.b16 %v1103
    %v1217 = vunpack.c.l.b16 %v1104
    %v1218 = vunpack.c.h.b16 %v1104
    %v1219 = vunpack.c.l.b16 %v1105
    %v1220 = vunpack.c.h.b16 %v1105
    %v1221 = vunpack.c.l.b16 %v1106
    %v1222 = vunpack.c.h.b16 %v1106
    %v1223 = vunpack.c.l.b16 %v1107
    %v1224 = vunpack.c.h.b16 %v1107
    %v1225 = vunpack.c.l.b16 %v1108
    %v1226 = vunpack.c.h.b16 %v1108
    %v1227 = vunpack.c.l.b16 %v1109
    %v1228 = vunpack.c.h.b16 %v1109
    %v1229 = vunpack.c.l.b16 %v1110
    %v1230 = vunpack.c.h.b16 %v1110
    %v1231 = vunpack.c.l.b16 %v1111
    %v1232 = vunpack.c.h.b16 %v1111
    %v1233 = vunpack.c.l.b16 %v1112
    %v1234 = vunpack.c.h.b16 %v1112
    %v1235 = vunpack.c.l.b16 %v1113
    %v1236 = vunpack.c.h.b16 %v1113
    %v1237 = vunpack.c.l.b16 %v1114
    %v1238 = vunpack.c.h.b16 %v1114
    %v1239 = vunpack.c.l.b16 %v1115
    %v1240 = vunpack.c.h.b16 %v1115
    %v1241 = vunpack.c.l.b16 %v1116
    %v1242 = vunpack.c.h.b16 %v1116
    %v1243 = vunpack.c.l.b16 %v1117
    %v1244 = vunpack.c.h.b16 %v1117
    %v1245 = vunpack.c.l.b16 %v1118
    %v1246 = vunpack.c.h.b16 %v1118
    %v1247 = vunpack.c.l.b16 %v1119
    %v1248 = vunpack.c.h.b16 %v1119
    %v1249 = vunpack.c.l.b16 %v1120
    %v1250 = vunpack.c.h.b16 %v1120
    %v1251 = vunpack.c.l.b16 %v1121
    %v1252 = vunpack.c.h.b16 %v1121
    %v1253 = vunpack.c.l.b16 %v1122
    %v1254 = vunpack.c.h.b16 %v1122
    %v1255 = vunpack.c.l.b16 %v1123
    %v1256 = vunpack.c.h.b16 %v1123
    %v1257 = vunpack.c.l.b16 %v1124
    %v1258 = vunpack.c.h.b16 %v1124
    %v1259 = vunpack.c.l.b16 %v1125
    %v1260 = vunpack.c.h.b16 %v1125
    %v1261 = vunpack.c.l.b16 %v1126
    %v1262 = vunpack.c.h.b16 %v1126
    %v1263 = vunpack.c.l.b16 %v1127
    %v1264 = vunpack.c.h.b16 %v1127
    %v1265 = vunpack.c.l.b16 %v1128
    %v1266 = vunpack.c.h.b16 %v1128
    %v1267 = vunpack.c.l.b16 %v1129
    %v1268 = vunpack.c.h.b16 %v1129
    %v1269 = vunpack.c.l.b16 %v1130
    %v1270 = vunpack.c.h.b16 %v1130
    %v1271 = vunpack.c.l.b16 %v1131
    %v1272 = vunpack.c.h.b16 %v1131
    %v1273 = vunpack.c.l.b16 %v1132
    %v1274 = vunpack.c.h.b16 %v1132
    %v1275 = vunpack.c.l.b16 %v1133
    %v1276 = vunpack.c.h.b16 %v1133
    %v1277 = vunpack.c.l.b16 %v1134
    %v1278 = vunpack.c.h.b16 %v1134
    %v1279 = vunpack.c.l.b16 %v1135
    %v1280 = vunpack.c.h.b16 %v1135
    %v1281 = vunpack.c.l.b16 %v1136
    %v1282 = vunpack.c.h.b16 %v1136
    %v1283 = vunpack.c.l.b16 %v1137
    %v1284 = vunpack.c.h.b16 %v1137
    %v1285 = vunpack.c.l.b16 %v1138
    %v1286 = vunpack.c.h.b16 %v1138
    %v1287 = vunpack.c.l.b16 %v1139
    %v1288 = vunpack.c.h.b16 %v1139
    %v1289 = vunpack.c.l.b16 %v1140
    %v1290 = vunpack.c.h.b16 %v1140
    %v1291 = vunpack.c.l.b16 %v1141
    %v1292 = vunpack.c.h.b16 %v1141
    %v1293 = vunpack.c.l.b16 %v1142
    %v1294 = vunpack.c.h.b16 %v1142
    %v1295 = vunpack.c.l.b16 %v1143
    %v1296 = vunpack.c.h.b16 %v1143
    %v1297 = vunpack.c.l.b16 %v1144
    %v1298 = vunpack.c.h.b16 %v1144
    %v1299 = vunpack.c.l.b16 %v1145
    %v1300 = vunpack.c.h.b16 %v1145
    %v1301 = vunpack.c.l.b16 %v1146
    %v1302 = vunpack.c.h.b16 %v1146
    %v1303 = vpack.c.b16 %v1209, %v1207
    %v1304 = vpack.c.b16 %v1210, %v1208
    %v1305 = vpack.c.b16 %v1213, %v1211
    %v1306 = vpack.c.b16 %v1214, %v1212
    %v1307 = vpack.c.b16 %v1217, %v1215
    %v1308 = vpack.c.b16 %v1218, %v1216
    %v1309 = vpack.c.b16 %v1221, %v1219
    %v1310 = vpack.c.b16 %v1222, %v1220
    %v1311 = vpack.c.b16 %v1225, %v1223
    %v1312 = vpack.c.b16 %v1226, %v1224
    %v1313 = vpack.c.b16 %v1229, %v1227
    %v1314 = vpack.c.b16 %v1230, %v1228
    %v1315 = vpack.c.b16 %v1233, %v1231
    %v1316 = vpack.c.b16 %v1234, %v1232
    %v1317 = vpack.c.b16 %v1237, %v1235
    %v1318 = vpack.c.b16 %v1238, %v1236
    %v1319 = vpack.c.b16 %v1241, %v1239
    %v1320 = vpack.c.b16 %v1242, %v1240
    %v1321 = vpack.c.b16 %v1245, %v1243
    %v1322 = vpack.c.b16 %v1246, %v1244
    %v1323 = vpack.c.b16 %v1249, %v1247
    %v1324 = vpack.c.b16 %v1250, %v1248
    %v1325 = vpack.c.b16 %v1253, %v1251
    %v1326 = vpack.c.b16 %v1254, %v1252
    %v1327 = vpack.c.b16 %v1257, %v1255
    %v1328 = vpack.c.b16 %v1258, %v1256
    %v1329 = vpack.c.b16 %v1261, %v1259
    %v1330 = vpack.c.b16 %v1262, %v1260
    %v1331 = vpack.c.b16 %v1265, %v1263
    %v1332 = vpack.c.b16 %v1266, %v1264
    %v1333 = vpack.c.b16 %v1269, %v1267
    %v1334 = vpack.c.b16 %v1270, %v1268
    %v1335 = vpack.c.b16 %v1273, %v1271
    %v1336 = vpack.c.b16 %v1274, %v1272
    %v1337 = vpack.c.b16 %v1277, %v1275
    %v1338 = vpack.c.b16 %v1278, %v1276
    %v1339 = vpack.c.b16 %v1281, %v1279
    %v1340 = vpack.c.b16 %v1282, %v1280
    %v1341 = vpack.c.b16 %v1285, %v1283
    %v1342 = vpack.c.b16 %v1286, %v1284
    %v1343 = vpack.c.b16 %v1289, %v1287
    %v1344 = vpack.c.b16 %v1290, %v1288
    %v1345 = vpack.c.b16 %v1293, %v1291
    %v1346 = vpack.c.b16 %v1294, %v1292
    %v1347 = vpack.c.b16 %v1297, %v1295
    %v1348 = vpack.c.b16 %v1298, %v1296
    %v1349 = vpack.c.b16 %v1301, %v1299
    %v1350 = vpack.c.b16 %v1302, %v1300
    %1399 = vmatprep.subr.bf16.mxu0 %v1304
    %1400 = vmatpush1.bf16.msra.mxu0 %v1303
    %1401 = vmatprep.subr.bf16.mxu0 %v1306
    %1402 = vmatpush1.bf16.msra.mxu0 %v1305
    %1403 = vmatprep.subr.bf16.mxu0 %v1308
    %1404 = vmatpush1.bf16.msra.mxu0 %v1307
    %1405 = vmatprep.subr.bf16.mxu0 %v1310
    %1406 = vmatpush1.bf16.msra.mxu0 %v1309
    %1407 = vmatprep.subr.bf16.mxu0 %v1312
    %1408 = vmatpush1.bf16.msra.mxu0 %v1311
    %1409 = vmatprep.subr.bf16.mxu0 %v1314
    %1410 = vmatpush1.bf16.msra.mxu0 %v1313
    %1411 = vmatprep.subr.bf16.mxu0 %v1316
    %1412 = vmatpush1.bf16.msra.mxu0 %v1315
    %1413 = vmatprep.subr.bf16.mxu0 %v1318
    %1414 = vmatpush1.bf16.msra.mxu0 %v1317
    %1415 = vmatprep.subr.bf16.mxu0 %v1320
    %1416 = vmatpush1.bf16.msra.mxu0 %v1319
    %1417 = vmatprep.subr.bf16.mxu0 %v1322
    %1418 = vmatpush1.bf16.msra.mxu0 %v1321
    %1419 = vmatprep.subr.bf16.mxu0 %v1324
    %1420 = vmatpush1.bf16.msra.mxu0 %v1323
    %1421 = vmatprep.subr.bf16.mxu0 %v1326
    %1422 = vmatpush1.bf16.msra.mxu0 %v1325
    %1423 = vmatprep.subr.bf16.mxu0 %v1328
    %1424 = vmatpush1.bf16.msra.mxu0 %v1327
    %1425 = vmatprep.subr.bf16.mxu0 %v1330
    %1426 = vmatpush1.bf16.msra.mxu0 %v1329
    %1427 = vmatprep.subr.bf16.mxu0 %v1332
    %1428 = vmatpush1.bf16.msra.mxu0 %v1331
    %1429 = vmatprep.subr.bf16.mxu0 %v1334
    %1430 = vmatpush1.bf16.msra.mxu0 %v1333
    %1431 = vmatprep.mubr.bf16.mxu0 %v1097
    %1432 = vmatmul.mubr.bf16.gmra.mrb[0].mxu0 %v1096
    %v1433 = vpop.f32.mrb[0].mxu0
    %v1434 = vadd.f32 %v1152, %v1433
    %v1435 = vpop.f32.mrb[0].mxu0
    %v1436 = vadd.f32 %v1156, %v1435
    %v1437 = vpop.f32.mrb[0].mxu0
    %v1438 = vpop.f32.mrb[0].mxu0
    %1439 = vdwg.mxu0
    %1440 = vmatprep.subr.bf16.mxu0 %v1336
    %1441 = vmatpush1.bf16.msra.mxu0 %v1335
    %1442 = vmatprep.subr.bf16.mxu0 %v1338
    %1443 = vmatpush1.bf16.msra.mxu0 %v1337
    %1444 = vmatprep.subr.bf16.mxu0 %v1340
    %1445 = vmatpush1.bf16.msra.mxu0 %v1339
    %1446 = vmatprep.subr.bf16.mxu0 %v1342
    %1447 = vmatpush1.bf16.msra.mxu0 %v1341
    %1448 = vmatprep.subr.bf16.mxu0 %v1344
    %1449 = vmatpush1.bf16.msra.mxu0 %v1343
    %1450 = vmatprep.subr.bf16.mxu0 %v1346
    %1451 = vmatpush1.bf16.msra.mxu0 %v1345
    %1452 = vmatprep.subr.bf16.mxu0 %v1348
    %1453 = vmatpush1.bf16.msra.mxu0 %v1347
    %1454 = vmatprep.subr.bf16.mxu0 %v1350
    %1455 = vmatpush1.bf16.msra.mxu0 %v1349
    %1456 = vmatprep.subr.bf16.mxu0 0
    %1457 = vmatpush1.bf16.msra.mxu0 0
    %1458 = vmatprep.subr.bf16.mxu0 0
    %1459 = vmatpush1.bf16.msra.mxu0 0
    %1460 = vmatprep.subr.bf16.mxu0 0
    %1461 = vmatpush1.bf16.msra.mxu0 0
    %1462 = vmatprep.subr.bf16.mxu0 0
    %1463 = vmatpush1.bf16.msra.mxu0 0
    %1464 = vmatprep.subr.bf16.mxu0 0
    %1465 = vmatpush1.bf16.msra.mxu0 0
    %1466 = vmatprep.subr.bf16.mxu0 0
    %1467 = vmatpush1.bf16.msra.mxu0 0
    %1468 = vmatprep.subr.bf16.mxu0 0
    %1469 = vmatpush1.bf16.msra.mxu0 0
    %1470 = vmatprep.subr.bf16.mxu0 0
    %1471 = vmatpush1.bf16.msra.mxu0 0
    %1472 = vmatprep.mubr.bf16.mxu0 0
    %1473 = vmatmul.mubr.bf16.gmra.mrb[0].mxu0 %v1098
    %v1474 = vpop.f32.mrb[0].mxu0
    %v1475 = vadd.f32 %v1434, %v1474
    %v1476 = vpop.f32.mrb[0].mxu0
    %v1477 = vadd.f32 %v1436, %v1476
    %v1478 = vpop.f32.mrb[0].mxu0
    %v1479 = vpop.f32.mrb[0].mxu0
    %1480 = vdwg.mxu0
    %v1481 = vmax.f32 %v1475, 0.0
    %v1482 = vmax.f32 %v1477, 0.0
    %v1485 = vcombine.low %v1481, %v1482
    %v1487 = vunpack.c.l.s4 1983009808
    %v1488 = vunpack.c.0.s8 %v1487
    %v1489 = vlaneseq
    %v1490 = vshrl.u32 %v1489, 7
    %v1491 = vsub.s32 %v1488, %v1490
    %v1492 = vrot.slane %v1485, %v1491
    %v1493 = vcombine.high %v1492, %v1492
    %v1495 = vunpack.c.l.s4 1983009808
    %v1496 = vunpack.c.0.s8 %v1495
    %v1497 = vlaneseq
    %v1498 = vshrl.u32 %v1497, 7
    %v1499 = vsub.s32 %v1496, %v1498
    %v1500 = vrot.slane %v1492, %v1499
    %v1501 = vcombine.high %v1500, %v1500
    %v1503 = vunpack.c.l.s4 1983009808
    %v1504 = vunpack.c.0.s8 %v1503
    %v1505 = vlaneseq
    %v1506 = vshrl.u32 %v1505, 7
    %v1507 = vsub.s32 %v1504, %v1506
    %v1508 = vrot.slane %v1493, %v1507
    %v1509 = vcombine.high %v1508, %v1508
    %v1514 = vsel %vm996, %v1500, -inf
    %v1515 = vrot.slane %v1514, 4
    %v1516 = vmax.f32 %v1514, %v1515
    %v1517 = vrot.slane %v1516, 2
    %v1518 = vmax.f32 %v1516, %v1517
    %v1519 = vrot.slane %v1518, 1
    %v1520 = vmax.f32 %v1518, %v1519
    %v1521 = vsel %vm996, %v1501, -inf
    %v1522 = vrot.slane %v1521, 4
    %v1523 = vmax.f32 %v1521, %v1522
    %v1524 = vrot.slane %v1523, 2
    %v1525 = vmax.f32 %v1523, %v1524
    %v1526 = vrot.slane %v1525, 1
    %v1527 = vmax.f32 %v1525, %v1526
    %v1528 = vsel %vm996, %v1508, -inf
    %v1529 = vrot.slane %v1528, 4
    %v1530 = vmax.f32 %v1528, %v1529
    %v1531 = vrot.slane %v1530, 2
    %v1532 = vmax.f32 %v1530, %v1531
    %v1533 = vrot.slane %v1532, 1
    %v1534 = vmax.f32 %v1532, %v1533
    %v1535 = vsel %vm996, %v1509, -inf
    %v1536 = vrot.slane %v1535, 4
    %v1537 = vmax.f32 %v1535, %v1536
    %v1538 = vrot.slane %v1537, 2
    %v1539 = vmax.f32 %v1537, %v1538
    %v1540 = vrot.slane %v1539, 1
    %v1541 = vmax.f32 %v1539, %v1540
    %v1542 = vpack.c.bf16 %v1520, %v1520
    %v1543 = vpack.c.bf16 %v1527, %v1527
    %v1544 = vpack.c.bf16 %v1534, %v1534
    %v1545 = vpack.c.bf16 %v1541, %v1541
    %v1546 = vld [vmem:[%s9] sm:$0xff]
    %v1547 = vld [vmem:[%s9 + $0x8] sm:$0xff]
    %v1548 = vld [vmem:[%s9 + $0x10] sm:$0xff]
    %v1549 = vld [vmem:[%s9 + $0x18] sm:$0xff]
    %v1550 = vld [vmem:[%s9 + $0x20] sm:$0xff]
    %v1551 = vld [vmem:[%s9 + $0x28] sm:$0xff]
    %v1552 = vld [vmem:[%s9 + $0x30] sm:$0xff]
    %v1553 = vld [vmem:[%s9 + $0x38] sm:$0xff]
    %v1554 = vld [vmem:[%s9 + $0x40] sm:$0xff]
    %v1555 = vld [vmem:[%s9 + $0x48] sm:$0xff]
    %v1556 = vld [vmem:[%s9 + $0x50] sm:$0xff]
    %v1557 = vld [vmem:[%s9 + $0x58] sm:$0xff]
    %v1558 = vld [vmem:[%s9 + $0x60] sm:$0xff]
    %v1559 = vld [vmem:[%s9 + $0x68] sm:$0xff]
    %v1560 = vld [vmem:[%s9 + $0x70] sm:$0xff]
    %v1561 = vld [vmem:[%s9 + $0x78] sm:$0xff]
    %v1562 = vld [vmem:[%s9 + $0x80] sm:$0xff]
    %v1563 = vld [vmem:[%s9 + $0x88] sm:$0xff]
    %v1564 = vld [vmem:[%s9 + $0x90] sm:$0xff]
    %v1565 = vld [vmem:[%s9 + $0x98] sm:$0xff]
    %v1566 = vld [vmem:[%s9 + $0xa0] sm:$0xff]
    %v1567 = vld [vmem:[%s9 + $0xa8] sm:$0xff]
    %v1568 = vld [vmem:[%s9 + $0xb0] sm:$0xff]
    %v1569 = vld [vmem:[%s9 + $0xb8] sm:$0xff]
    %v1570 = vld [vmem:[%s9 + $0xc0] sm:$0xff]
    %v1571 = vld [vmem:[%s9 + $0xc8] sm:$0xff]
    %v1572 = vld [vmem:[%s9 + $0xd0] sm:$0xff]
    %v1573 = vld [vmem:[%s9 + $0xd8] sm:$0xff]
    %v1574 = vld [vmem:[%s9 + $0xe0] sm:$0xff]
    %v1575 = vld [vmem:[%s9 + $0xe8] sm:$0xff]
    %v1576 = vld [vmem:[%s9 + $0xf0] sm:$0xff]
    %v1577 = vld [vmem:[%s9 + $0xf8] sm:$0xff]
    %v1578 = vld [vmem:[%s9 + $0x100] sm:$0xff]
    %v1579 = vld [vmem:[%s9 + $0x108] sm:$0xff]
    %v1580 = vld [vmem:[%s9 + $0x110] sm:$0xff]
    %v1581 = vld [vmem:[%s9 + $0x118] sm:$0xff]
    %v1582 = vld [vmem:[%s9 + $0x120] sm:$0xff]
    %v1583 = vld [vmem:[%s9 + $0x128] sm:$0xff]
    %v1584 = vld [vmem:[%s9 + $0x130] sm:$0xff]
    %v1585 = vld [vmem:[%s9 + $0x138] sm:$0xff]
    %v1586 = vld [vmem:[%s9 + $0x140] sm:$0xff]
    %v1587 = vld [vmem:[%s9 + $0x148] sm:$0xff]
    %v1588 = vld [vmem:[%s9 + $0x150] sm:$0xff]
    %v1589 = vld [vmem:[%s9 + $0x158] sm:$0xff]
    %v1590 = vld [vmem:[%s9 + $0x160] sm:$0xff]
    %v1591 = vld [vmem:[%s9 + $0x168] sm:$0xff]
    %v1592 = vld [vmem:[%s9 + $0x170] sm:$0xff]
    %v1593 = vld [vmem:[%s9 + $0x178] sm:$0xff]
    %v1594 = vld [vmem:[%s9 + $0x180] sm:$0xff]
    %v1595 = vld [vmem:[%s9 + $0x188] sm:$0xff]
    %v1596 = vld [vmem:[%s9 + $0x190] sm:$0xff]
    %v1597 = vld [vmem:[%s9 + $0x198] sm:$0xff]
    %v1598 = vld [vmem:[%s9 + $0x1a0] sm:$0xff]
    %v1599 = vld [vmem:[%s9 + $0x1a8] sm:$0xff]
    %v1600 = vld [vmem:[%s9 + $0x1b0] sm:$0xff]
    %v1601 = vld [vmem:[%s9 + $0x1b8] sm:$0xff]
    %v1602 = vld [vmem:[%s9 + $0x1c0] sm:$0xff]
    %v1603 = vld [vmem:[%s9 + $0x1c8] sm:$0xff]
    %v1604 = vld [vmem:[%s9 + $0x1d0] sm:$0xff]
    %v1605 = vld [vmem:[%s9 + $0x1d8] sm:$0xff]
    %v1606 = vld [vmem:[%s9 + $0x1e0] sm:$0xff]
    %v1607 = vld [vmem:[%s9 + $0x1e8] sm:$0xff]
    %v1608 = vld [vmem:[%s9 + $0x1f0] sm:$0xff]
    %v1609 = vld [vmem:[%s9 + $0x1f8] sm:$0xff]
    %v1610 = vld [vmem:[%s10] sm:$0xf]
    %v1612 = vlaneseq
    %v1613 = vshrl.u32 %v1612, 7
    %v1614 = vsub.s32 0, %v1613
    %v1615 = vrot.slane %v1610, %v1614
    %v1616 = vlaneseq
    %v1617 = vshrl.u32 %v1616, 7
    %v1618 = vsub.s32 1, %v1617
    %v1619 = vrot.slane %v1610, %v1618
    %v1620 = vlaneseq
    %v1621 = vshrl.u32 %v1620, 7
    %v1622 = vsub.s32 2, %v1621
    %v1623 = vrot.slane %v1610, %v1622
    %v1624 = vlaneseq
    %v1625 = vshrl.u32 %v1624, 7
    %v1626 = vsub.s32 3, %v1625
    %v1627 = vrot.slane %v1610, %v1626
    %v1636 = vunpack.c.l.b16 %v1542
    %v1637 = vunpack.c.l.b16 %v1543
    %v1638 = vunpack.c.l.b16 %v1544
    %v1639 = vunpack.c.l.b16 %v1545
    %vm1640 = vcmask 1041409
    %v1641 = vsel %vm1640, %v1638, %v1636
    %v1642 = vsel %vm1640, %v1639, %v1637
    %v1643 = vpack.c.b16 %v1641, %v1641
    %v1644 = vpack.c.b16 %v1642, %v1642
    %v1711 = vunpack.c.l.b16 %v1546
    %v1712 = vunpack.c.h.b16 %v1546
    %v1713 = vunpack.c.l.b16 %v1547
    %v1714 = vunpack.c.h.b16 %v1547
    %v1715 = vunpack.c.l.b16 %v1548
    %v1716 = vunpack.c.h.b16 %v1548
    %v1717 = vunpack.c.l.b16 %v1549
    %v1718 = vunpack.c.h.b16 %v1549
    %v1719 = vunpack.c.l.b16 %v1550
    %v1720 = vunpack.c.h.b16 %v1550
    %v1721 = vunpack.c.l.b16 %v1551
    %v1722 = vunpack.c.h.b16 %v1551
    %v1723 = vunpack.c.l.b16 %v1552
    %v1724 = vunpack.c.h.b16 %v1552
    %v1725 = vunpack.c.l.b16 %v1553
    %v1726 = vunpack.c.h.b16 %v1553
    %v1727 = vunpack.c.l.b16 %v1554
    %v1728 = vunpack.c.h.b16 %v1554
    %v1729 = vunpack.c.l.b16 %v1555
    %v1730 = vunpack.c.h.b16 %v1555
    %v1731 = vunpack.c.l.b16 %v1556
    %v1732 = vunpack.c.h.b16 %v1556
    %v1733 = vunpack.c.l.b16 %v1557
    %v1734 = vunpack.c.h.b16 %v1557
    %v1735 = vunpack.c.l.b16 %v1558
    %v1736 = vunpack.c.h.b16 %v1558
    %v1737 = vunpack.c.l.b16 %v1559
    %v1738 = vunpack.c.h.b16 %v1559
    %v1739 = vunpack.c.l.b16 %v1560
    %v1740 = vunpack.c.h.b16 %v1560
    %v1741 = vunpack.c.l.b16 %v1561
    %v1742 = vunpack.c.h.b16 %v1561
    %v1743 = vunpack.c.l.b16 %v1562
    %v1744 = vunpack.c.h.b16 %v1562
    %v1745 = vunpack.c.l.b16 %v1563
    %v1746 = vunpack.c.h.b16 %v1563
    %v1747 = vunpack.c.l.b16 %v1564
    %v1748 = vunpack.c.h.b16 %v1564
    %v1749 = vunpack.c.l.b16 %v1565
    %v1750 = vunpack.c.h.b16 %v1565
    %v1751 = vunpack.c.l.b16 %v1566
    %v1752 = vunpack.c.h.b16 %v1566
    %v1753 = vunpack.c.l.b16 %v1567
    %v1754 = vunpack.c.h.b16 %v1567
    %v1755 = vunpack.c.l.b16 %v1568
    %v1756 = vunpack.c.h.b16 %v1568
    %v1757 = vunpack.c.l.b16 %v1569
    %v1758 = vunpack.c.h.b16 %v1569
    %v1759 = vunpack.c.l.b16 %v1570
    %v1760 = vunpack.c.h.b16 %v1570
    %v1761 = vunpack.c.l.b16 %v1571
    %v1762 = vunpack.c.h.b16 %v1571
    %v1763 = vunpack.c.l.b16 %v1572
    %v1764 = vunpack.c.h.b16 %v1572
    %v1765 = vunpack.c.l.b16 %v1573
    %v1766 = vunpack.c.h.b16 %v1573
    %v1767 = vunpack.c.l.b16 %v1574
    %v1768 = vunpack.c.h.b16 %v1574
    %v1769 = vunpack.c.l.b16 %v1575
    %v1770 = vunpack.c.h.b16 %v1575
    %v1771 = vunpack.c.l.b16 %v1576
    %v1772 = vunpack.c.h.b16 %v1576
    %v1773 = vunpack.c.l.b16 %v1577
    %v1774 = vunpack.c.h.b16 %v1577
    %v1775 = vunpack.c.l.b16 %v1578
    %v1776 = vunpack.c.h.b16 %v1578
    %v1777 = vunpack.c.l.b16 %v1579
    %v1778 = vunpack.c.h.b16 %v1579
    %v1779 = vunpack.c.l.b16 %v1580
    %v1780 = vunpack.c.h.b16 %v1580
    %v1781 = vunpack.c.l.b16 %v1581
    %v1782 = vunpack.c.h.b16 %v1581
    %v1783 = vunpack.c.l.b16 %v1582
    %v1784 = vunpack.c.h.b16 %v1582
    %v1785 = vunpack.c.l.b16 %v1583
    %v1786 = vunpack.c.h.b16 %v1583
    %v1787 = vunpack.c.l.b16 %v1584
    %v1788 = vunpack.c.h.b16 %v1584
    %v1789 = vunpack.c.l.b16 %v1585
    %v1790 = vunpack.c.h.b16 %v1585
    %v1791 = vunpack.c.l.b16 %v1586
    %v1792 = vunpack.c.h.b16 %v1586
    %v1793 = vunpack.c.l.b16 %v1587
    %v1794 = vunpack.c.h.b16 %v1587
    %v1795 = vunpack.c.l.b16 %v1588
    %v1796 = vunpack.c.h.b16 %v1588
    %v1797 = vunpack.c.l.b16 %v1589
    %v1798 = vunpack.c.h.b16 %v1589
    %v1799 = vunpack.c.l.b16 %v1590
    %v1800 = vunpack.c.h.b16 %v1590
    %v1801 = vunpack.c.l.b16 %v1591
    %v1802 = vunpack.c.h.b16 %v1591
    %v1803 = vunpack.c.l.b16 %v1592
    %v1804 = vunpack.c.h.b16 %v1592
    %v1805 = vunpack.c.l.b16 %v1593
    %v1806 = vunpack.c.h.b16 %v1593
    %v1807 = vunpack.c.l.b16 %v1594
    %v1808 = vunpack.c.h.b16 %v1594
    %v1809 = vunpack.c.l.b16 %v1595
    %v1810 = vunpack.c.h.b16 %v1595
    %v1811 = vunpack.c.l.b16 %v1596
    %v1812 = vunpack.c.h.b16 %v1596
    %v1813 = vunpack.c.l.b16 %v1597
    %v1814 = vunpack.c.h.b16 %v1597
    %v1815 = vunpack.c.l.b16 %v1598
    %v1816 = vunpack.c.h.b16 %v1598
    %v1817 = vunpack.c.l.b16 %v1599
    %v1818 = vunpack.c.h.b16 %v1599
    %v1819 = vunpack.c.l.b16 %v1600
    %v1820 = vunpack.c.h.b16 %v1600
    %v1821 = vunpack.c.l.b16 %v1601
    %v1822 = vunpack.c.h.b16 %v1601
    %v1823 = vunpack.c.l.b16 %v1602
    %v1824 = vunpack.c.h.b16 %v1602
    %v1825 = vunpack.c.l.b16 %v1603
    %v1826 = vunpack.c.h.b16 %v1603
    %v1827 = vunpack.c.l.b16 %v1604
    %v1828 = vunpack.c.h.b16 %v1604
    %v1829 = vunpack.c.l.b16 %v1605
    %v1830 = vunpack.c.h.b16 %v1605
    %v1831 = vunpack.c.l.b16 %v1606
    %v1832 = vunpack.c.h.b16 %v1606
    %v1833 = vunpack.c.l.b16 %v1607
    %v1834 = vunpack.c.h.b16 %v1607
    %v1835 = vunpack.c.l.b16 %v1608
    %v1836 = vunpack.c.h.b16 %v1608
    %v1837 = vunpack.c.l.b16 %v1609
    %v1838 = vunpack.c.h.b16 %v1609
    %v1839 = vpack.c.b16 %v1715, %v1711
    %v1840 = vpack.c.b16 %v1716, %v1712
    %v1841 = vpack.c.b16 %v1717, %v1713
    %v1842 = vpack.c.b16 %v1718, %v1714
    %v1843 = vpack.c.b16 %v1723, %v1719
    %v1844 = vpack.c.b16 %v1724, %v1720
    %v1845 = vpack.c.b16 %v1725, %v1721
    %v1846 = vpack.c.b16 %v1726, %v1722
    %v1847 = vpack.c.b16 %v1731, %v1727
    %v1848 = vpack.c.b16 %v1732, %v1728
    %v1849 = vpack.c.b16 %v1733, %v1729
    %v1850 = vpack.c.b16 %v1734, %v1730
    %v1851 = vpack.c.b16 %v1739, %v1735
    %v1852 = vpack.c.b16 %v1740, %v1736
    %v1853 = vpack.c.b16 %v1741, %v1737
    %v1854 = vpack.c.b16 %v1742, %v1738
    %v1855 = vpack.c.b16 %v1747, %v1743
    %v1856 = vpack.c.b16 %v1748, %v1744
    %v1857 = vpack.c.b16 %v1749, %v1745
    %v1858 = vpack.c.b16 %v1750, %v1746
    %v1859 = vpack.c.b16 %v1755, %v1751
    %v1860 = vpack.c.b16 %v1756, %v1752
    %v1861 = vpack.c.b16 %v1757, %v1753
    %v1862 = vpack.c.b16 %v1758, %v1754
    %v1863 = vpack.c.b16 %v1763, %v1759
    %v1864 = vpack.c.b16 %v1764, %v1760
    %v1865 = vpack.c.b16 %v1765, %v1761
    %v1866 = vpack.c.b16 %v1766, %v1762
    %v1867 = vpack.c.b16 %v1771, %v1767
    %v1868 = vpack.c.b16 %v1772, %v1768
    %v1869 = vpack.c.b16 %v1773, %v1769
    %v1870 = vpack.c.b16 %v1774, %v1770
    %v1871 = vpack.c.b16 %v1779, %v1775
    %v1872 = vpack.c.b16 %v1780, %v1776
    %v1873 = vpack.c.b16 %v1781, %v1777
    %v1874 = vpack.c.b16 %v1782, %v1778
    %v1875 = vpack.c.b16 %v1787, %v1783
    %v1876 = vpack.c.b16 %v1788, %v1784
    %v1877 = vpack.c.b16 %v1789, %v1785
    %v1878 = vpack.c.b16 %v1790, %v1786
    %v1879 = vpack.c.b16 %v1795, %v1791
    %v1880 = vpack.c.b16 %v1796, %v1792
    %v1881 = vpack.c.b16 %v1797, %v1793
    %v1882 = vpack.c.b16 %v1798, %v1794
    %v1883 = vpack.c.b16 %v1803, %v1799
    %v1884 = vpack.c.b16 %v1804, %v1800
    %v1885 = vpack.c.b16 %v1805, %v1801
    %v1886 = vpack.c.b16 %v1806, %v1802
    %v1887 = vpack.c.b16 %v1811, %v1807
    %v1888 = vpack.c.b16 %v1812, %v1808
    %v1889 = vpack.c.b16 %v1813, %v1809
    %v1890 = vpack.c.b16 %v1814, %v1810
    %v1891 = vpack.c.b16 %v1819, %v1815
    %v1892 = vpack.c.b16 %v1820, %v1816
    %v1893 = vpack.c.b16 %v1821, %v1817
    %v1894 = vpack.c.b16 %v1822, %v1818
    %v1895 = vpack.c.b16 %v1827, %v1823
    %v1896 = vpack.c.b16 %v1828, %v1824
    %v1897 = vpack.c.b16 %v1829, %v1825
    %v1898 = vpack.c.b16 %v1830, %v1826
    %v1899 = vpack.c.b16 %v1835, %v1831
    %v1900 = vpack.c.b16 %v1836, %v1832
    %v1901 = vpack.c.b16 %v1837, %v1833
    %v1902 = vpack.c.b16 %v1838, %v1834
    %1967 = vmatprep.subr.bf16.mxu0 %v1840
    %1968 = vmatpush1.bf16.msra.mxu0 %v1839
    %1969 = vmatprep.subr.bf16.mxu0 %v1844
    %1970 = vmatpush1.bf16.msra.mxu0 %v1843
    %1971 = vmatprep.subr.bf16.mxu0 %v1848
    %1972 = vmatpush1.bf16.msra.mxu0 %v1847
    %1973 = vmatprep.subr.bf16.mxu0 %v1852
    %1974 = vmatpush1.bf16.msra.mxu0 %v1851
    %1975 = vmatprep.subr.bf16.mxu0 %v1856
    %1976 = vmatpush1.bf16.msra.mxu0 %v1855
    %1977 = vmatprep.subr.bf16.mxu0 %v1860
    %1978 = vmatpush1.bf16.msra.mxu0 %v1859
    %1979 = vmatprep.subr.bf16.mxu0 %v1864
    %1980 = vmatpush1.bf16.msra.mxu0 %v1863
    %1981 = vmatprep.subr.bf16.mxu0 %v1868
    %1982 = vmatpush1.bf16.msra.mxu0 %v1867
    %1983 = vmatprep.subr.bf16.mxu0 %v1872
    %1984 = vmatpush1.bf16.msra.mxu0 %v1871
    %1985 = vmatprep.subr.bf16.mxu0 %v1876
    %1986 = vmatpush1.bf16.msra.mxu0 %v1875
    %1987 = vmatprep.subr.bf16.mxu0 %v1880
    %1988 = vmatpush1.bf16.msra.mxu0 %v1879
    %1989 = vmatprep.subr.bf16.mxu0 %v1884
    %1990 = vmatpush1.bf16.msra.mxu0 %v1883
    %1991 = vmatprep.subr.bf16.mxu0 %v1888
    %1992 = vmatpush1.bf16.msra.mxu0 %v1887
    %1993 = vmatprep.subr.bf16.mxu0 %v1892
    %1994 = vmatpush1.bf16.msra.mxu0 %v1891
    %1995 = vmatprep.subr.bf16.mxu0 %v1896
    %1996 = vmatpush1.bf16.msra.mxu0 %v1895
    %1997 = vmatprep.subr.bf16.mxu0 %v1900
    %1998 = vmatpush1.bf16.msra.mxu0 %v1899
    %1999 = vmatprep.mubr.bf16.mxu0 %v1644
    %2000 = vmatmul.mubr.bf16.gmra.mrb[0].mxu0 %v1643
    %v2001 = vpop.f32.mrb[0].mxu0
    %v2002 = vadd.f32 %v1615, %v2001
    %v2003 = vpop.f32.mrb[0].mxu0
    %v2004 = vadd.f32 %v1619, %v2003
    %v2005 = vpop.f32.mrb[0].mxu0
    %v2006 = vpop.f32.mrb[0].mxu0
    %2007 = vdwg.mxu0
    %2008 = vmatprep.subr.bf16.mxu0 %v1842
    %2009 = vmatpush1.bf16.msra.mxu0 %v1841
    %2010 = vmatprep.subr.bf16.mxu0 %v1846
    %2011 = vmatpush1.bf16.msra.mxu0 %v1845
    %2012 = vmatprep.subr.bf16.mxu0 %v1850
    %2013 = vmatpush1.bf16.msra.mxu0 %v1849
    %2014 = vmatprep.subr.bf16.mxu0 %v1854
    %2015 = vmatpush1.bf16.msra.mxu0 %v1853
    %2016 = vmatprep.subr.bf16.mxu0 %v1858
    %2017 = vmatpush1.bf16.msra.mxu0 %v1857
    %2018 = vmatprep.subr.bf16.mxu0 %v1862
    %2019 = vmatpush1.bf16.msra.mxu0 %v1861
    %2020 = vmatprep.subr.bf16.mxu0 %v1866
    %2021 = vmatpush1.bf16.msra.mxu0 %v1865
    %2022 = vmatprep.subr.bf16.mxu0 %v1870
    %2023 = vmatpush1.bf16.msra.mxu0 %v1869
    %2024 = vmatprep.subr.bf16.mxu0 %v1874
    %2025 = vmatpush1.bf16.msra.mxu0 %v1873
    %2026 = vmatprep.subr.bf16.mxu0 %v1878
    %2027 = vmatpush1.bf16.msra.mxu0 %v1877
    %2028 = vmatprep.subr.bf16.mxu0 %v1882
    %2029 = vmatpush1.bf16.msra.mxu0 %v1881
    %2030 = vmatprep.subr.bf16.mxu0 %v1886
    %2031 = vmatpush1.bf16.msra.mxu0 %v1885
    %2032 = vmatprep.subr.bf16.mxu0 %v1890
    %2033 = vmatpush1.bf16.msra.mxu0 %v1889
    %2034 = vmatprep.subr.bf16.mxu0 %v1894
    %2035 = vmatpush1.bf16.msra.mxu0 %v1893
    %2036 = vmatprep.subr.bf16.mxu0 %v1898
    %2037 = vmatpush1.bf16.msra.mxu0 %v1897
    %2038 = vmatprep.subr.bf16.mxu0 %v1902
    %2039 = vmatpush1.bf16.msra.mxu0 %v1901
    %2040 = vmatprep.mubr.bf16.mxu0 %v1644
    %2041 = vmatmul.mubr.bf16.gmra.mrb[0].mxu0 %v1643
    %v2042 = vpop.f32.mrb[0].mxu0
    %v2043 = vadd.f32 %v1623, %v2042
    %v2044 = vpop.f32.mrb[0].mxu0
    %v2045 = vadd.f32 %v1627, %v2044
    %v2046 = vpop.f32.mrb[0].mxu0
    %v2047 = vpop.f32.mrb[0].mxu0
    %2048 = vdwg.mxu0
    %v2049 = vmax.f32 %v2002, 0.0
    %v2050 = vmax.f32 %v2004, 0.0
    %v2051 = vmax.f32 %v2043, 0.0
    %v2052 = vmax.f32 %v2045, 0.0
    %v2053 = vpack.c.bf16 %v2049, %v2049
    %v2054 = vpack.c.bf16 %v2050, %v2050
    %v2055 = vpack.c.bf16 %v2051, %v2051
    %v2056 = vpack.c.bf16 %v2052, %v2052
    %v2057 = vld [vmem:[%s11] sm:$0xf]
    %v2058 = vld [vmem:[%s11 + $0x4] sm:$0xf]
    %v2059 = vld [vmem:[%s11 + $0x8] sm:$0xf]
    %v2060 = vld [vmem:[%s11 + $0xc] sm:$0xf]
    %v2061 = vld [vmem:[%s11 + $0x10] sm:$0xf]
    %v2062 = vld [vmem:[%s11 + $0x14] sm:$0xf]
    %v2063 = vld [vmem:[%s11 + $0x18] sm:$0xf]
    %v2064 = vld [vmem:[%s11 + $0x1c] sm:$0xf]
    %v2065 = vld [vmem:[%s11 + $0x20] sm:$0xf]
    %v2066 = vld [vmem:[%s11 + $0x24] sm:$0xf]
    %v2067 = vld [vmem:[%s11 + $0x28] sm:$0xf]
    %v2068 = vld [vmem:[%s11 + $0x2c] sm:$0xf]
    %v2069 = vld [vmem:[%s11 + $0x30] sm:$0xf]
    %v2070 = vld [vmem:[%s11 + $0x34] sm:$0xf]
    %v2071 = vld [vmem:[%s11 + $0x38] sm:$0xf]
    %v2072 = vld [vmem:[%s11 + $0x3c] sm:$0xf]
    %v2073 = vld [vmem:[%s11 + $0x40] sm:$0xf]
    %v2074 = vld [vmem:[%s11 + $0x44] sm:$0xf]
    %v2075 = vld [vmem:[%s11 + $0x48] sm:$0xf]
    %v2076 = vld [vmem:[%s11 + $0x4c] sm:$0xf]
    %v2077 = vld [vmem:[%s11 + $0x50] sm:$0xf]
    %v2078 = vld [vmem:[%s11 + $0x54] sm:$0xf]
    %v2079 = vld [vmem:[%s11 + $0x58] sm:$0xf]
    %v2080 = vld [vmem:[%s11 + $0x5c] sm:$0xf]
    %v2081 = vld [vmem:[%s11 + $0x60] sm:$0xf]
    %v2082 = vld [vmem:[%s11 + $0x64] sm:$0xf]
    %v2083 = vld [vmem:[%s11 + $0x68] sm:$0xf]
    %v2084 = vld [vmem:[%s11 + $0x6c] sm:$0xf]
    %v2085 = vld [vmem:[%s11 + $0x70] sm:$0xf]
    %v2086 = vld [vmem:[%s11 + $0x74] sm:$0xf]
    %v2087 = vld [vmem:[%s11 + $0x78] sm:$0xf]
    %v2088 = vld [vmem:[%s11 + $0x7c] sm:$0xf]
    %v2089 = vld [vmem:[%s11 + $0x80] sm:$0xf]
    %v2090 = vld [vmem:[%s11 + $0x84] sm:$0xf]
    %v2091 = vld [vmem:[%s11 + $0x88] sm:$0xf]
    %v2092 = vld [vmem:[%s11 + $0x8c] sm:$0xf]
    %v2093 = vld [vmem:[%s11 + $0x90] sm:$0xf]
    %v2094 = vld [vmem:[%s11 + $0x94] sm:$0xf]
    %v2095 = vld [vmem:[%s11 + $0x98] sm:$0xf]
    %v2096 = vld [vmem:[%s11 + $0x9c] sm:$0xf]
    %v2097 = vld [vmem:[%s11 + $0xa0] sm:$0xf]
    %v2098 = vld [vmem:[%s11 + $0xa4] sm:$0xf]
    %v2099 = vld [vmem:[%s11 + $0xa8] sm:$0xf]
    %v2100 = vld [vmem:[%s11 + $0xac] sm:$0xf]
    %v2101 = vld [vmem:[%s11 + $0xb0] sm:$0xf]
    %v2102 = vld [vmem:[%s11 + $0xb4] sm:$0xf]
    %v2103 = vld [vmem:[%s11 + $0xb8] sm:$0xf]
    %v2104 = vld [vmem:[%s11 + $0xbc] sm:$0xf]
    %v2105 = vld [vmem:[%s11 + $0xc0] sm:$0xf]
    %v2106 = vld [vmem:[%s11 + $0xc4] sm:$0xf]
    %v2107 = vld [vmem:[%s11 + $0xc8] sm:$0xf]
    %v2108 = vld [vmem:[%s11 + $0xcc] sm:$0xf]
    %v2109 = vld [vmem:[%s11 + $0xd0] sm:$0xf]
    %v2110 = vld [vmem:[%s11 + $0xd4] sm:$0xf]
    %v2111 = vld [vmem:[%s11 + $0xd8] sm:$0xf]
    %v2112 = vld [vmem:[%s11 + $0xdc] sm:$0xf]
    %v2113 = vld [vmem:[%s11 + $0xe0] sm:$0xf]
    %v2114 = vld [vmem:[%s11 + $0xe4] sm:$0xf]
    %v2115 = vld [vmem:[%s11 + $0xe8] sm:$0xf]
    %v2116 = vld [vmem:[%s11 + $0xec] sm:$0xf]
    %v2117 = vld [vmem:[%s11 + $0xf0] sm:$0xf]
    %v2118 = vld [vmem:[%s11 + $0xf4] sm:$0xf]
    %v2119 = vld [vmem:[%s11 + $0xf8] sm:$0xf]
    %v2120 = vld [vmem:[%s11 + $0xfc] sm:$0xf]
    %v2121 = vld [vmem:[%s12] sm:$0x1]
    %v2123 = vlaneseq
    %v2124 = vshrl.u32 %v2123, 7
    %v2125 = vsub.s32 0, %v2124
    %v2126 = vrot.slane %v2121, %v2125
    %v2192 = vunpack.c.l.b16 %v2057
    %v2193 = vunpack.c.l.b16 %v2058
    %v2194 = vunpack.c.l.b16 %v2059
    %v2195 = vunpack.c.l.b16 %v2060
    %v2196 = vunpack.c.l.b16 %v2061
    %v2197 = vunpack.c.l.b16 %v2062
    %v2198 = vunpack.c.l.b16 %v2063
    %v2199 = vunpack.c.l.b16 %v2064
    %v2200 = vunpack.c.l.b16 %v2065
    %v2201 = vunpack.c.l.b16 %v2066
    %v2202 = vunpack.c.l.b16 %v2067
    %v2203 = vunpack.c.l.b16 %v2068
    %v2204 = vunpack.c.l.b16 %v2069
    %v2205 = vunpack.c.l.b16 %v2070
    %v2206 = vunpack.c.l.b16 %v2071
    %v2207 = vunpack.c.l.b16 %v2072
    %v2208 = vunpack.c.l.b16 %v2073
    %v2209 = vunpack.c.l.b16 %v2074
    %v2210 = vunpack.c.l.b16 %v2075
    %v2211 = vunpack.c.l.b16 %v2076
    %v2212 = vunpack.c.l.b16 %v2077
    %v2213 = vunpack.c.l.b16 %v2078
    %v2214 = vunpack.c.l.b16 %v2079
    %v2215 = vunpack.c.l.b16 %v2080
    %v2216 = vunpack.c.l.b16 %v2081
    %v2217 = vunpack.c.l.b16 %v2082
    %v2218 = vunpack.c.l.b16 %v2083
    %v2219 = vunpack.c.l.b16 %v2084
    %v2220 = vunpack.c.l.b16 %v2085
    %v2221 = vunpack.c.l.b16 %v2086
    %v2222 = vunpack.c.l.b16 %v2087
    %v2223 = vunpack.c.l.b16 %v2088
    %v2224 = vunpack.c.l.b16 %v2089
    %v2225 = vunpack.c.l.b16 %v2090
    %v2226 = vunpack.c.l.b16 %v2091
    %v2227 = vunpack.c.l.b16 %v2092
    %v2228 = vunpack.c.l.b16 %v2093
    %v2229 = vunpack.c.l.b16 %v2094
    %v2230 = vunpack.c.l.b16 %v2095
    %v2231 = vunpack.c.l.b16 %v2096
    %v2232 = vunpack.c.l.b16 %v2097
    %v2233 = vunpack.c.l.b16 %v2098
    %v2234 = vunpack.c.l.b16 %v2099
    %v2235 = vunpack.c.l.b16 %v2100
    %v2236 = vunpack.c.l.b16 %v2101
    %v2237 = vunpack.c.l.b16 %v2102
    %v2238 = vunpack.c.l.b16 %v2103
    %v2239 = vunpack.c.l.b16 %v2104
    %v2240 = vunpack.c.l.b16 %v2105
    %v2241 = vunpack.c.l.b16 %v2106
    %v2242 = vunpack.c.l.b16 %v2107
    %v2243 = vunpack.c.l.b16 %v2108
    %v2244 = vunpack.c.l.b16 %v2109
    %v2245 = vunpack.c.l.b16 %v2110
    %v2246 = vunpack.c.l.b16 %v2111
    %v2247 = vunpack.c.l.b16 %v2112
    %v2248 = vunpack.c.l.b16 %v2113
    %v2249 = vunpack.c.l.b16 %v2114
    %v2250 = vunpack.c.l.b16 %v2115
    %v2251 = vunpack.c.l.b16 %v2116
    %v2252 = vunpack.c.l.b16 %v2117
    %v2253 = vunpack.c.l.b16 %v2118
    %v2254 = vunpack.c.l.b16 %v2119
    %v2255 = vunpack.c.l.b16 %v2120
    %v2256 = vpack.c.b16 %v2193, %v2192
    %v2257 = vpack.c.b16 %v2195, %v2194
    %v2258 = vpack.c.b16 %v2197, %v2196
    %v2259 = vpack.c.b16 %v2199, %v2198
    %v2260 = vpack.c.b16 %v2201, %v2200
    %v2261 = vpack.c.b16 %v2203, %v2202
    %v2262 = vpack.c.b16 %v2205, %v2204
    %v2263 = vpack.c.b16 %v2207, %v2206
    %v2264 = vpack.c.b16 %v2209, %v2208
    %v2265 = vpack.c.b16 %v2211, %v2210
    %v2266 = vpack.c.b16 %v2213, %v2212
    %v2267 = vpack.c.b16 %v2215, %v2214
    %v2268 = vpack.c.b16 %v2217, %v2216
    %v2269 = vpack.c.b16 %v2219, %v2218
    %v2270 = vpack.c.b16 %v2221, %v2220
    %v2271 = vpack.c.b16 %v2223, %v2222
    %v2272 = vpack.c.b16 %v2225, %v2224
    %v2273 = vpack.c.b16 %v2227, %v2226
    %v2274 = vpack.c.b16 %v2229, %v2228
    %v2275 = vpack.c.b16 %v2231, %v2230
    %v2276 = vpack.c.b16 %v2233, %v2232
    %v2277 = vpack.c.b16 %v2235, %v2234
    %v2278 = vpack.c.b16 %v2237, %v2236
    %v2279 = vpack.c.b16 %v2239, %v2238
    %v2280 = vpack.c.b16 %v2241, %v2240
    %v2281 = vpack.c.b16 %v2243, %v2242
    %v2282 = vpack.c.b16 %v2245, %v2244
    %v2283 = vpack.c.b16 %v2247, %v2246
    %v2284 = vpack.c.b16 %v2249, %v2248
    %v2285 = vpack.c.b16 %v2251, %v2250
    %v2286 = vpack.c.b16 %v2253, %v2252
    %v2287 = vpack.c.b16 %v2255, %v2254
    %2320 = vmatprep.subr.bf16.mxu0 0
    %2321 = vmatpush1.bf16.msra.mxu0 %v2256
    %2322 = vmatprep.subr.bf16.mxu0 0
    %2323 = vmatpush1.bf16.msra.mxu0 %v2257
    %2324 = vmatprep.subr.bf16.mxu0 0
    %2325 = vmatpush1.bf16.msra.mxu0 %v2258
    %2326 = vmatprep.subr.bf16.mxu0 0
    %2327 = vmatpush1.bf16.msra.mxu0 %v2259
    %2328 = vmatprep.subr.bf16.mxu0 0
    %2329 = vmatpush1.bf16.msra.mxu0 %v2260
    %2330 = vmatprep.subr.bf16.mxu0 0
    %2331 = vmatpush1.bf16.msra.mxu0 %v2261
    %2332 = vmatprep.subr.bf16.mxu0 0
    %2333 = vmatpush1.bf16.msra.mxu0 %v2262
    %2334 = vmatprep.subr.bf16.mxu0 0
    %2335 = vmatpush1.bf16.msra.mxu0 %v2263
    %2336 = vmatprep.subr.bf16.mxu0 0
    %2337 = vmatpush1.bf16.msra.mxu0 %v2264
    %2338 = vmatprep.subr.bf16.mxu0 0
    %2339 = vmatpush1.bf16.msra.mxu0 %v2265
    %2340 = vmatprep.subr.bf16.mxu0 0
    %2341 = vmatpush1.bf16.msra.mxu0 %v2266
    %2342 = vmatprep.subr.bf16.mxu0 0
    %2343 = vmatpush1.bf16.msra.mxu0 %v2267
    %2344 = vmatprep.subr.bf16.mxu0 0
    %2345 = vmatpush1.bf16.msra.mxu0 %v2268
    %2346 = vmatprep.subr.bf16.mxu0 0
    %2347 = vmatpush1.bf16.msra.mxu0 %v2269
    %2348 = vmatprep.subr.bf16.mxu0 0
    %2349 = vmatpush1.bf16.msra.mxu0 %v2270
    %2350 = vmatprep.subr.bf16.mxu0 0
    %2351 = vmatpush1.bf16.msra.mxu0 %v2271
    %2352 = vmatprep.mubr.bf16.mxu0 %v2054
    %2353 = vmatmul.mubr.bf16.gmra.mrb[0].mxu0 %v2053
    %v2354 = vpop.f32.mrb[0].mxu0
    %v2355 = vadd.f32 %v2126, %v2354
    %v2356 = vpop.f32.mrb[0].mxu0
    %v2357 = vpop.f32.mrb[0].mxu0
    %v2358 = vpop.f32.mrb[0].mxu0
    %2359 = vdwg.mxu0
    %2360 = vmatprep.subr.bf16.mxu0 0
    %2361 = vmatpush1.bf16.msra.mxu0 %v2272
    %2362 = vmatprep.subr.bf16.mxu0 0
    %2363 = vmatpush1.bf16.msra.mxu0 %v2273
    %2364 = vmatprep.subr.bf16.mxu0 0
    %2365 = vmatpush1.bf16.msra.mxu0 %v2274
    %2366 = vmatprep.subr.bf16.mxu0 0
    %2367 = vmatpush1.bf16.msra.mxu0 %v2275
    %2368 = vmatprep.subr.bf16.mxu0 0
    %2369 = vmatpush1.bf16.msra.mxu0 %v2276
    %2370 = vmatprep.subr.bf16.mxu0 0
    %2371 = vmatpush1.bf16.msra.mxu0 %v2277
    %2372 = vmatprep.subr.bf16.mxu0 0
    %2373 = vmatpush1.bf16.msra.mxu0 %v2278
    %2374 = vmatprep.subr.bf16.mxu0 0
    %2375 = vmatpush1.bf16.msra.mxu0 %v2279
    %2376 = vmatprep.subr.bf16.mxu0 0
    %2377 = vmatpush1.bf16.msra.mxu0 %v2280
    %2378 = vmatprep.subr.bf16.mxu0 0
    %2379 = vmatpush1.bf16.msra.mxu0 %v2281
    %2380 = vmatprep.subr.bf16.mxu0 0
    %2381 = vmatpush1.bf16.msra.mxu0 %v2282
    %2382 = vmatprep.subr.bf16.mxu0 0
    %2383 = vmatpush1.bf16.msra.mxu0 %v2283
    %2384 = vmatprep.subr.bf16.mxu0 0
    %2385 = vmatpush1.bf16.msra.mxu0 %v2284
    %2386 = vmatprep.subr.bf16.mxu0 0
    %2387 = vmatpush1.bf16.msra.mxu0 %v2285
    %2388 = vmatprep.subr.bf16.mxu0 0
    %2389 = vmatpush1.bf16.msra.mxu0 %v2286
    %2390 = vmatprep.subr.bf16.mxu0 0
    %2391 = vmatpush1.bf16.msra.mxu0 %v2287
    %2392 = vmatprep.mubr.bf16.mxu0 %v2056
    %2393 = vmatmul.mubr.bf16.gmra.mrb[0].mxu0 %v2055
    %v2394 = vpop.f32.mrb[0].mxu0
    %v2395 = vadd.f32 %v2355, %v2394
    %v2396 = vpop.f32.mrb[0].mxu0
    %v2397 = vpop.f32.mrb[0].mxu0
    %v2398 = vpop.f32.mrb[0].mxu0
    %2399 = vdwg.mxu0
    %v2400 = vmax.f32 %v2395, 0.0
    %v2401 = vand.u32 2147483647, %v2395
    %v2402 = vsub.f32 0.0, %v2401
    %v2403 = vmul.f32 %v2402, 1.442695
    %v2404 = vpow.pop %v2403
    %v2405 = vadd.f32 %v2404, 1.0
    %v2406 = vlog2.pop %v2405
    %v2407 = vmul.f32 %v2406, 0.6931472
    %v2408 = vmul.f32 -0.5, %v2404
    %v2409 = vadd.f32 %v2408, 1.0
    %v2410 = vmul.f32 %v2409, %v2404
    %v2411 = vand.u32 2147483647, %v2404
    %vm2412 = vcmp.lt.f32.partialorder %v2411, 0.0004427343
    %v2413 = vsel %vm2412, %v2410, %v2407
    %v2414 = vadd.f32 %v2400, %v2413
    %2415 = vst [vmem:[#allocation2] sm:$0x3] %v2414
    // Predicated region
    $region54: #{enhanced_cnn_forward.1} parent=1 // pred_check
      _
    $region55: #{enhanced_cnn_forward.1} parent=1 // pred_check_branch
      %2417 = sbr.rel (0) target = $region57
    $region56: #{enhanced_cnn_forward.1} parent=1 // pred_region
      %s2419 = ssub.s32 32, 32
      %2420 = vsyncadd [#allocation3], %s2419
      %s2422 = sshll.u32 [#allocation2], 4
      %s2423 = int_to_ptr.vmem [resolvable:$true] %s2422
      %2425 = dma.vmem_to_hbm [thread:$0]  %s2423, 32, %s13, [#allocation3]
    $region57: #{enhanced_cnn_forward.1} parent=1 // pred_fallthru
      _
    // Predicated region
    $region58: #{enhanced_cnn_forward.1} parent=1 // pred_check
      _
    $region59: #{enhanced_cnn_forward.1} parent=1 // pred_check_branch
      %2427 = sbr.rel (0) target = $region61
    $region60: #{enhanced_cnn_forward.1} parent=1 // pred_region
      %2428 = dma.done [#allocation3], 32
    $region61: #{enhanced_cnn_forward.1} parent=1 // pred_fallthru
      _
    %2429 = vsyncpa [#allocation3], 1

</llo_original>
